<compile_context>
chip_gen: v7x
topology: tpu7x:2x2x1
jax: 0.10.0
libtpu: 0.0.40
codegen_flags: <defaults>
</compile_context>

<pallas_src>
import functools

import jax
import jax.numpy as jnp
from jax.experimental import pallas as pl
from jax.experimental.pallas import tpu as pltpu

_LANE = 128


def _round_up(x, m):
    return (x + m - 1) // m * m


def fire_kernel(xm_ref, xt_ref, xb_ref, wsq_ref, bsq_ref, we1_ref, be1_ref,
                we3_ref, be3_ref, out_ref):
    # xm_ref: (1, TH, W, Cinp) bf16  -- the row tile itself
    # xt_ref: (1, 1, W, Cinp)  bf16  -- row just above the tile (clamped at edge)
    # xb_ref: (1, 1, W, Cinp)  bf16  -- row just below the tile (clamped at edge)
    # wsq_ref: (Cinp, Csqp)  bf16   bsq_ref: (1, Csqp) f32
    # we1_ref: (Csqp, Ce1p)  bf16   be1_ref: (1, Ce1p) f32
    # we3_ref: (9*Csqp, Ce3p) bf16  be3_ref: (1, Ce3p) f32
    # out_ref: (1, TH, W, Ce1p + Ce3p) f32
    TH, W, Cinp = xm_ref.shape[1], xm_ref.shape[2], xm_ref.shape[3]
    Csqp = wsq_ref.shape[1]
    Ce1p = we1_ref.shape[1]
    Ce3p = we3_ref.shape[1]
    M = TH * W                # output rows of this tile
    L = M + 2 * W             # rows incl. 1-row halo top + bottom

    t_id = pl.program_id(1)
    n_t = pl.num_programs(1)

    x_m = xm_ref[0].reshape(M, Cinp)      # free reshape (minor dim unchanged)
    x_t = xt_ref[0, 0]                    # (W, Cinp)
    x_b = xb_ref[0, 0]                    # (W, Cinp)

    w_sq = wsq_ref[...]
    b_sq = bsq_ref[...]

    # --- squeeze: 1x1 conv (bf16 MXU, f32 acc) + bias + ReLU (f32 epilogue) ---
    def squeeze(xx):
        y = jnp.dot(xx, w_sq, preferred_element_type=jnp.float32)
        return jnp.maximum(y + b_sq, 0.0)

    s_m = squeeze(x_m)                                        # (M, Csqp)
    # Halo rows that fall outside the image must be zero *in s-space*
    # (Conv2d(padding=1) zero-pads the squeeze output, not the raw input).
    s_t = jnp.where(t_id == 0, 0.0, squeeze(x_t))             # (W, Csqp)
    s_b = jnp.where(t_id == n_t - 1, 0.0, squeeze(x_b))       # (W, Csqp)

    # --- expand1x1 on the tile rows ---
    e1 = jnp.dot(s_m.astype(jnp.bfloat16), we1_ref[...],
                 preferred_element_type=jnp.float32)
    e1 = jnp.maximum(e1 + be1_ref[...], 0.0)

    # --- expand3x3 as a single im2col matmul (K = 9*Csqp) ---
    # Tap k = (ky, kx): output flat row i needs s_full at row i + (1+ddy)*W + ddx.
    # Realized as a static XLU roll of s_full plus a column (x-boundary) mask;
    # row wrap-around of the roll only hits positions the mask zeroes anyway.
    s_full = jnp.concatenate([s_t, s_m, s_b], axis=0)          # (L, Csqp) f32
    xcol = jax.lax.broadcasted_iota(jnp.int32, (M, Csqp), 0) % W
    taps = []
    for k in range(9):
        ddy, ddx = k // 3 - 1, k % 3 - 1
        base = (1 + ddy) * W + ddx            # offset into the halo'd rows
        tap = pltpu.roll(s_full, (-base) % L, axis=0)[:M]
        if ddx == -1:
            tap = jnp.where(xcol >= 1, tap, 0.0)
        elif ddx == 1:
            tap = jnp.where(xcol < W - 1, tap, 0.0)
        taps.append(tap.astype(jnp.bfloat16))
    col = jnp.concatenate(taps, axis=-1)      # (M, 9*Csqp), lane-aligned pieces
    e3 = jnp.dot(col, we3_ref[...], preferred_element_type=jnp.float32)
    e3 = jnp.maximum(e3 + be3_ref[...], 0.0)

    # --- direct, lane-aligned stores into disjoint channel ranges (no concat) ---
    out_ref[0, :, :, :Ce1p] = e1.reshape(TH, W, Ce1p)
    out_ref[0, :, :, Ce1p:] = e3.reshape(TH, W, Ce3p)


def fire_forward(x_nchw, wsq, bsq, we1, be1, we3, be3, *, tile_h=None):
    """Fire forward.  x_nchw: (N, Cin, H, W) f32 -> (N, Ce1+Ce3, H, W) f32.

    Weight layouts (matmul-friendly):
      wsq (Cin, Csq), bsq (1, Csq), we1 (Csq, Ce1), be1 (1, Ce1),
      we3 (9, Csq, Ce3) with tap index k = ky*3 + kx, be3 (1, Ce3).
    """
    N, Cin, H, W = x_nchw.shape
    Csq, Ce1, Ce3 = wsq.shape[1], we1.shape[1], we3.shape[2]
    Cinp, Csqp = _round_up(Cin, _LANE), _round_up(Csq, _LANE)
    Ce1p, Ce3p = _round_up(Ce1, _LANE), _round_up(Ce3, _LANE)
    Coutp = Ce1p + Ce3p

    if tile_h is None:    # largest divisor of H giving <= ~1024 rows per tile
        tile_h = max([d for d in range(1, H + 1)
                      if H % d == 0 and d * W <= 1024] or [1])
    assert H % tile_h == 0
    n_tiles = H // tile_h

    # NCHW -> NHWC, pad channels to the lane width, bf16 for the MXU operands.
    # TODO(synk): keep the surrounding model NHWC end-to-end to drop these
    # activation transposes entirely.
    x = jnp.transpose(x_nchw, (0, 2, 3, 1))
    x = jnp.pad(x, ((0, 0), (0, 0), (0, 0), (0, Cinp - Cin))).astype(jnp.bfloat16)

    # Weights: zero-pad to lane multiples once; bf16 operands, f32 biases.
    wsq_p = jnp.pad(wsq, ((0, Cinp - Cin), (0, Csqp - Csq))).astype(jnp.bfloat16)
    bsq_p = jnp.pad(bsq, ((0, 0), (0, Csqp - Csq))).astype(jnp.float32)
    we1_p = jnp.pad(we1, ((0, Csqp - Csq), (0, Ce1p - Ce1))).astype(jnp.bfloat16)
    be1_p = jnp.pad(be1, ((0, 0), (0, Ce1p - Ce1))).astype(jnp.float32)
    we3_p = jnp.pad(we3, ((0, 0), (0, Csqp - Csq), (0, Ce3p - Ce3)))
    we3_mat = we3_p.reshape(9 * Csqp, Ce3p).astype(jnp.bfloat16)
    be3_p = jnp.pad(be3, ((0, 0), (0, Ce3p - Ce3))).astype(jnp.float32)

    # Halo rows: single-row blocks of the *same* activation array, with index
    # maps clamped at the image edges (out-of-image rows are zeroed in-kernel
    # in s-space) -> no overlapping-tile materialization, no extra HBM copy.
    def top_map(n, t):
        return (n, jnp.maximum(t * tile_h - 1, 0), 0, 0)

    def bot_map(n, t):
        return (n, jnp.minimum((t + 1) * tile_h, H - 1), 0, 0)

    out_padded = pl.pallas_call(
        fire_kernel,
        out_shape=jax.ShapeDtypeStruct((N, H, W, Coutp), jnp.float32),
        grid=(N, n_tiles),
        in_specs=[
            pl.BlockSpec((1, tile_h, W, Cinp), lambda n, t: (n, t, 0, 0)),
            pl.BlockSpec((1, 1, W, Cinp), top_map),
            pl.BlockSpec((1, 1, W, Cinp), bot_map),
            pl.BlockSpec(wsq_p.shape, lambda n, t: (0, 0)),
            pl.BlockSpec(bsq_p.shape, lambda n, t: (0, 0)),
            pl.BlockSpec(we1_p.shape, lambda n, t: (0, 0)),
            pl.BlockSpec(be1_p.shape, lambda n, t: (0, 0)),
            pl.BlockSpec(we3_mat.shape, lambda n, t: (0, 0)),
            pl.BlockSpec(be3_p.shape, lambda n, t: (0, 0)),
        ],
        out_specs=pl.BlockSpec((1, tile_h, W, Coutp),
                               lambda n, t: (n, t, 0, 0)),
        compiler_params=pltpu.CompilerParams(
            dimension_semantics=("parallel", "parallel")),
    )(x, x, x, wsq_p, bsq_p, we1_p, be1_p, we3_mat, be3_p)

    # Drop channel padding, back to NCHW (XLA fuses slice + transpose).
    out = jnp.concatenate(
        [out_padded[..., :Ce1], out_padded[..., Ce1p:Ce1p + Ce3]], axis=-1)
    return jnp.transpose(out, (0, 3, 1, 2))


def fire_reference(x, wsq, bsq, we1, be1, we3, be3):
    """Pure-JAX f32 reference (lax.conv) matching nn.Conv2d semantics."""
    def conv1x1(inp, w, b):
        y = jnp.einsum('nchw,cd->ndhw', inp, w) + b.reshape(1, -1, 1, 1)
        return jax.nn.relu(y)

    s = conv1x1(x, wsq, bsq)
    e1 = conv1x1(s, we1, be1)
    Csq, Ce3 = we3.shape[1], we3.shape[2]
    w3_oihw = jnp.transpose(we3.reshape(3, 3, Csq, Ce3), (3, 2, 0, 1))
    e3 = jax.lax.conv_general_dilated(
        s, w3_oihw, window_strides=(1, 1), padding='SAME',
        dimension_numbers=('NCHW', 'OIHW', 'NCHW'))
    e3 = jax.nn.relu(e3 + be3.reshape(1, -1, 1, 1))
    return jnp.concatenate([e1, e3], axis=1)


if __name__ == "__main__":
    # Module config (small, consistent with Fire(inplanes, sq, e1, e3))
    N, Cin, H, W = 2, 4, 16, 16
    Csq, Ce1, Ce3 = 4, 8, 8

    key = jax.random.PRNGKey(0)
    ks = jax.random.split(key, 7)
    x = jax.random.normal(ks[0], (N, Cin, H, W), jnp.float32)

    # Parameters in matmul-friendly layouts:
    #   squeeze   weight torch (Csq,Cin,1,1)  -> here (Cin, Csq)
    #   expand1x1 weight torch (Ce1,Csq,1,1)  -> here (Csq, Ce1)
    #   expand3x3 weight torch (Ce3,Csq,3,3)  -> here (9, Csq, Ce3) (HWIO flat)
    wsq = jax.random.normal(ks[1], (Cin, Csq), jnp.float32) * 0.2
    bsq = jax.random.normal(ks[2], (1, Csq), jnp.float32) * 0.1
    we1 = jax.random.normal(ks[3], (Csq, Ce1), jnp.float32) * 0.2
    be1 = jax.random.normal(ks[4], (1, Ce1), jnp.float32) * 0.1
    we3 = jax.random.normal(ks[5], (9, Csq, Ce3), jnp.float32) * 0.2
    be3 = jax.random.normal(ks[6], (1, Ce3), jnp.float32) * 0.1

    # tile_h=8 -> 2 row-tiles per image: exercises the cross-tile halo path.
    fire = jax.jit(fire_forward, static_argnames=("tile_h",))
    out = fire(x, wsq, bsq, we1, be1, we3, be3, tile_h=8)
    out = jax.block_until_ready(out)

    ref = fire_reference(x, wsq, bsq, we1, be1, we3, be3)
    assert out.shape == (N, Ce1 + Ce3, H, W), out.shape
    max_err = float(jnp.max(jnp.abs(out - ref)))
    # bf16 MXU operands with f32 accumulation -> tolerance loosened vs pure f32.
    assert jnp.allclose(out, ref, atol=2e-2, rtol=2e-2), max_err

    print("KERNEL_OK")
</pallas_src>

<mosaic_0001>
module attributes {stable_mosaic.version = 11 : i64} {
  func.func @fire_kernel(%arg0: i32, %arg1: i32, %arg2: memref<1x8x16x128xbf16, #tpu.memory_space<vmem>>, %arg3: memref<1x1x16x128xbf16, #tpu.memory_space<vmem>>, %arg4: memref<1x1x16x128xbf16, #tpu.memory_space<vmem>>, %arg5: memref<128x128xbf16, #tpu.memory_space<vmem>>, %arg6: memref<1x128xf32, #tpu.memory_space<vmem>>, %arg7: memref<128x128xbf16, #tpu.memory_space<vmem>>, %arg8: memref<1x128xf32, #tpu.memory_space<vmem>>, %arg9: memref<1152x128xbf16, #tpu.memory_space<vmem>>, %arg10: memref<1x128xf32, #tpu.memory_space<vmem>>, %arg11: memref<1x8x16x256xf32, #tpu.memory_space<vmem>>) attributes {dimension_semantics = [#tpu.dimension_semantics<parallel>, #tpu.dimension_semantics<parallel>], iteration_bounds = array<i64: 2, 2>, scalar_prefetch = 0 : i64, scratch_operands = 0 : i64, tpu.core_type = #tpu.core_type<tc>, window_params = [{transform_indices = @transform_0, window_bounds = array<i64: 1, 8, 16, 128>}, {transform_indices = @transform_1, window_bounds = array<i64: 1, 1, 16, 128>}, {transform_indices = @transform_2, window_bounds = array<i64: 1, 1, 16, 128>}, {pipeline_mode = #tpu.pipeline_mode<synchronous>, transform_indices = @transform_3, window_bounds = array<i64: 128, 128>}, {pipeline_mode = #tpu.pipeline_mode<synchronous>, transform_indices = @transform_4, window_bounds = array<i64: 1, 128>}, {pipeline_mode = #tpu.pipeline_mode<synchronous>, transform_indices = @transform_5, window_bounds = array<i64: 128, 128>}, {pipeline_mode = #tpu.pipeline_mode<synchronous>, transform_indices = @transform_6, window_bounds = array<i64: 1, 128>}, {pipeline_mode = #tpu.pipeline_mode<synchronous>, transform_indices = @transform_7, window_bounds = array<i64: 1152, 128>}, {pipeline_mode = #tpu.pipeline_mode<synchronous>, transform_indices = @transform_8, window_bounds = array<i64: 1, 128>}, {transform_indices = @transform_9, window_bounds = array<i64: 1, 8, 16, 256>}]} {
    %c0 = arith.constant 0 : index
    %c0_0 = arith.constant 0 : index
    %c0_1 = arith.constant 0 : index
    %c0_2 = arith.constant 0 : index
    %0 = vector.load %arg2[%c0, %c0_0, %c0_1, %c0_2] : memref<1x8x16x128xbf16, #tpu.memory_space<vmem>>, vector<1x8x16x128xbf16>
    %1 = vector.shape_cast %0 : vector<1x8x16x128xbf16> to vector<8x16x128xbf16>
    %2 = vector.shape_cast %1 : vector<8x16x128xbf16> to vector<128x128xbf16>
    %c0_3 = arith.constant 0 : index
    %c0_4 = arith.constant 0 : index
    %c0_5 = arith.constant 0 : index
    %c0_6 = arith.constant 0 : index
    %3 = vector.load %arg3[%c0_3, %c0_4, %c0_5, %c0_6] : memref<1x1x16x128xbf16, #tpu.memory_space<vmem>>, vector<1x1x16x128xbf16>
    %4 = vector.shape_cast %3 : vector<1x1x16x128xbf16> to vector<16x128xbf16>
    %c0_7 = arith.constant 0 : index
    %c0_8 = arith.constant 0 : index
    %c0_9 = arith.constant 0 : index
    %c0_10 = arith.constant 0 : index
    %5 = vector.load %arg4[%c0_7, %c0_8, %c0_9, %c0_10] : memref<1x1x16x128xbf16, #tpu.memory_space<vmem>>, vector<1x1x16x128xbf16>
    %6 = vector.shape_cast %5 : vector<1x1x16x128xbf16> to vector<16x128xbf16>
    %c0_11 = arith.constant 0 : index
    %c0_12 = arith.constant 0 : index
    %7 = vector.load %arg5[%c0_11, %c0_12] : memref<128x128xbf16, #tpu.memory_space<vmem>>, vector<128x128xbf16>
    %c0_13 = arith.constant 0 : index
    %c0_14 = arith.constant 0 : index
    %8 = vector.load %arg6[%c0_13, %c0_14] : memref<1x128xf32, #tpu.memory_space<vmem>>, vector<1x128xf32>
    %cst = arith.constant dense<0.000000e+00> : vector<128x128xf32>
    %9 = tpu.matmul %2, %7, %cst {dimension_numbers = #tpu.dot_dimension_numbers<[1], [0], [0], [1], [0, 0, 1, 1], [], []>} : vector<128x128xbf16>, vector<128x128xbf16>, vector<128x128xf32> -> vector<128x128xf32>
    %10 = vector.broadcast %8 : vector<1x128xf32> to vector<128x128xf32>
    %11 = arith.addf %9, %10 : vector<128x128xf32>
    %cst_15 = arith.constant 0.000000e+00 : f32
    %12 = vector.broadcast %cst_15 : f32 to vector<128x128xf32>
    %13 = arith.maximumf %11, %12 : vector<128x128xf32>
    %c0_i32 = arith.constant 0 : i32
    %14 = arith.cmpi eq, %arg1, %c0_i32 : i32
    %cst_16 = arith.constant dense<0.000000e+00> : vector<16x128xf32>
    %15 = tpu.matmul %4, %7, %cst_16 {dimension_numbers = #tpu.dot_dimension_numbers<[1], [0], [0], [1], [0, 0, 1, 1], [], []>} : vector<16x128xbf16>, vector<128x128xbf16>, vector<16x128xf32> -> vector<16x128xf32>
    %16 = vector.broadcast %8 : vector<1x128xf32> to vector<16x128xf32>
    %17 = arith.addf %15, %16 : vector<16x128xf32>
    %cst_17 = arith.constant 0.000000e+00 : f32
    %18 = vector.broadcast %cst_17 : f32 to vector<16x128xf32>
    %19 = arith.maximumf %17, %18 : vector<16x128xf32>
    %cst_18 = arith.constant 0.000000e+00 : f32
    %20 = vector.broadcast %cst_18 : f32 to vector<16x128xf32>
    %21 = arith.select %14, %20, %19 : vector<16x128xf32>
    %c1_i32 = arith.constant 1 : i32
    %22 = arith.cmpi eq, %arg1, %c1_i32 : i32
    %cst_19 = arith.constant dense<0.000000e+00> : vector<16x128xf32>
    %23 = tpu.matmul %6, %7, %cst_19 {dimension_numbers = #tpu.dot_dimension_numbers<[1], [0], [0], [1], [0, 0, 1, 1], [], []>} : vector<16x128xbf16>, vector<128x128xbf16>, vector<16x128xf32> -> vector<16x128xf32>
    %24 = vector.broadcast %8 : vector<1x128xf32> to vector<16x128xf32>
    %25 = arith.addf %23, %24 : vector<16x128xf32>
    %cst_20 = arith.constant 0.000000e+00 : f32
    %26 = vector.broadcast %cst_20 : f32 to vector<16x128xf32>
    %27 = arith.maximumf %25, %26 : vector<16x128xf32>
    %cst_21 = arith.constant 0.000000e+00 : f32
    %28 = vector.broadcast %cst_21 : f32 to vector<16x128xf32>
    %29 = arith.select %22, %28, %27 : vector<16x128xf32>
    %30 = arith.truncf %13 : vector<128x128xf32> to vector<128x128xbf16>
    %c0_22 = arith.constant 0 : index
    %c0_23 = arith.constant 0 : index
    %31 = vector.load %arg7[%c0_22, %c0_23] : memref<128x128xbf16, #tpu.memory_space<vmem>>, vector<128x128xbf16>
    %cst_24 = arith.constant dense<0.000000e+00> : vector<128x128xf32>
    %32 = tpu.matmul %30, %31, %cst_24 {dimension_numbers = #tpu.dot_dimension_numbers<[1], [0], [0], [1], [0, 0, 1, 1], [], []>} : vector<128x128xbf16>, vector<128x128xbf16>, vector<128x128xf32> -> vector<128x128xf32>
    %c0_25 = arith.constant 0 : index
    %c0_26 = arith.constant 0 : index
    %33 = vector.load %arg8[%c0_25, %c0_26] : memref<1x128xf32, #tpu.memory_space<vmem>>, vector<1x128xf32>
    %34 = vector.broadcast %33 : vector<1x128xf32> to vector<128x128xf32>
    %35 = arith.addf %32, %34 : vector<128x128xf32>
    %cst_27 = arith.constant 0.000000e+00 : f32
    %36 = vector.broadcast %cst_27 : f32 to vector<128x128xf32>
    %37 = arith.maximumf %35, %36 : vector<128x128xf32>
    %38 = tpu.concatenate %21, %13, %29 in 0 : vector<16x128xf32>, vector<128x128xf32>, vector<16x128xf32> -> vector<160x128xf32>
    %39 = tpu.iota {dimensions = array<i32: 0>} : vector<128x128xi32>
    %c16_i32 = arith.constant 16 : i32
    %c0_i32_28 = arith.constant 0 : i32
    %40 = arith.cmpi eq, %c16_i32, %c0_i32_28 : i32
    %c1_i32_29 = arith.constant 1 : i32
    %41 = arith.select %40, %c1_i32_29, %c16_i32 : i32
    %42 = vector.broadcast %41 : i32 to vector<128x128xi32>
    %43 = arith.remsi %39, %42 : vector<128x128xi32>
    %c0_i32_30 = arith.constant 0 : i32
    %44 = vector.broadcast %c0_i32_30 : i32 to vector<128x128xi32>
    %45 = arith.cmpi ne, %43, %44 : vector<128x128xi32>
    %c0_i32_31 = arith.constant 0 : i32
    %46 = vector.broadcast %c0_i32_31 : i32 to vector<128x128xi32>
    %47 = arith.cmpi slt, %43, %46 : vector<128x128xi32>
    %c0_i32_32 = arith.constant 0 : i32
    %48 = arith.cmpi slt, %41, %c0_i32_32 : i32
    %49 = vector.broadcast %48 : i1 to vector<128x128xi1>
    %50 = vector.broadcast %49 : vector<128x128xi1> to vector<128x128xi1>
    %51 = arith.xori %47, %50 : vector<128x128xi1>
    %52 = arith.andi %51, %45 : vector<128x128xi1>
    %53 = vector.broadcast %41 : i32 to vector<128x128xi32>
    %54 = arith.addi %43, %53 : vector<128x128xi32>
    %55 = arith.select %52, %54, %43 : vector<128x128xi1>, vector<128x128xi32>
    %c1_i32_33 = arith.constant 1 : i32
    %56 = tpu.dynamic_rotate %38 by %c1_i32_33 dim 0 : vector<160x128xf32>, i32 -> vector<160x128xf32>
    %57 = vector.extract_strided_slice %56 {offsets = [0, 0], sizes = [128, 128], strides = [1, 1]} : vector<160x128xf32> to vector<128x128xf32>
    %c1_i32_34 = arith.constant 1 : i32
    %58 = vector.broadcast %c1_i32_34 : i32 to vector<128x128xi32>
    %59 = arith.cmpi sge, %55, %58 : vector<128x128xi32>
    %cst_35 = arith.constant 0.000000e+00 : f32
    %60 = vector.broadcast %cst_35 : f32 to vector<128x128xf32>
    %61 = arith.select %59, %57, %60 : vector<128x128xi1>, vector<128x128xf32>
    %62 = arith.truncf %61 : vector<128x128xf32> to vector<128x128xbf16>
    %c0_i32_36 = arith.constant 0 : i32
    %63 = tpu.dynamic_rotate %38 by %c0_i32_36 dim 0 : vector<160x128xf32>, i32 -> vector<160x128xf32>
    %64 = vector.extract_strided_slice %63 {offsets = [0, 0], sizes = [128, 128], strides = [1, 1]} : vector<160x128xf32> to vector<128x128xf32>
    %65 = arith.truncf %64 : vector<128x128xf32> to vector<128x128xbf16>
    %c159_i32 = arith.constant 159 : i32
    %66 = tpu.dynamic_rotate %38 by %c159_i32 dim 0 : vector<160x128xf32>, i32 -> vector<160x128xf32>
    %67 = vector.extract_strided_slice %66 {offsets = [0, 0], sizes = [128, 128], strides = [1, 1]} : vector<160x128xf32> to vector<128x128xf32>
    %c15_i32 = arith.constant 15 : i32
    %68 = vector.broadcast %c15_i32 : i32 to vector<128x128xi32>
    %69 = arith.cmpi slt, %55, %68 : vector<128x128xi32>
    %cst_37 = arith.constant 0.000000e+00 : f32
    %70 = vector.broadcast %cst_37 : f32 to vector<128x128xf32>
    %71 = arith.select %69, %67, %70 : vector<128x128xi1>, vector<128x128xf32>
    %72 = arith.truncf %71 : vector<128x128xf32> to vector<128x128xbf16>
    %c145_i32 = arith.constant 145 : i32
    %73 = tpu.dynamic_rotate %38 by %c145_i32 dim 0 : vector<160x128xf32>, i32 -> vector<160x128xf32>
    %74 = vector.extract_strided_slice %73 {offsets = [0, 0], sizes = [128, 128], strides = [1, 1]} : vector<160x128xf32> to vector<128x128xf32>
    %c1_i32_38 = arith.constant 1 : i32
    %75 = vector.broadcast %c1_i32_38 : i32 to vector<128x128xi32>
    %76 = arith.cmpi sge, %55, %75 : vector<128x128xi32>
    %cst_39 = arith.constant 0.000000e+00 : f32
    %77 = vector.broadcast %cst_39 : f32 to vector<128x128xf32>
    %78 = arith.select %76, %74, %77 : vector<128x128xi1>, vector<128x128xf32>
    %79 = arith.truncf %78 : vector<128x128xf32> to vector<128x128xbf16>
    %c144_i32 = arith.constant 144 : i32
    %80 = tpu.dynamic_rotate %38 by %c144_i32 dim 0 : vector<160x128xf32>, i32 -> vector<160x128xf32>
    %81 = vector.extract_strided_slice %80 {offsets = [0, 0], sizes = [128, 128], strides = [1, 1]} : vector<160x128xf32> to vector<128x128xf32>
    %82 = arith.truncf %81 : vector<128x128xf32> to vector<128x128xbf16>
    %c143_i32 = arith.constant 143 : i32
    %83 = tpu.dynamic_rotate %38 by %c143_i32 dim 0 : vector<160x128xf32>, i32 -> vector<160x128xf32>
    %84 = vector.extract_strided_slice %83 {offsets = [0, 0], sizes = [128, 128], strides = [1, 1]} : vector<160x128xf32> to vector<128x128xf32>
    %c15_i32_40 = arith.constant 15 : i32
    %85 = vector.broadcast %c15_i32_40 : i32 to vector<128x128xi32>
    %86 = arith.cmpi slt, %55, %85 : vector<128x128xi32>
    %cst_41 = arith.constant 0.000000e+00 : f32
    %87 = vector.broadcast %cst_41 : f32 to vector<128x128xf32>
    %88 = arith.select %86, %84, %87 : vector<128x128xi1>, vector<128x128xf32>
    %89 = arith.truncf %88 : vector<128x128xf32> to vector<128x128xbf16>
    %c129_i32 = arith.constant 129 : i32
    %90 = tpu.dynamic_rotate %38 by %c129_i32 dim 0 : vector<160x128xf32>, i32 -> vector<160x128xf32>
    %91 = vector.extract_strided_slice %90 {offsets = [0, 0], sizes = [128, 128], strides = [1, 1]} : vector<160x128xf32> to vector<128x128xf32>
    %c1_i32_42 = arith.constant 1 : i32
    %92 = vector.broadcast %c1_i32_42 : i32 to vector<128x128xi32>
    %93 = arith.cmpi sge, %55, %92 : vector<128x128xi32>
    %cst_43 = arith.constant 0.000000e+00 : f32
    %94 = vector.broadcast %cst_43 : f32 to vector<128x128xf32>
    %95 = arith.select %93, %91, %94 : vector<128x128xi1>, vector<128x128xf32>
    %96 = arith.truncf %95 : vector<128x128xf32> to vector<128x128xbf16>
    %c128_i32 = arith.constant 128 : i32
    %97 = tpu.dynamic_rotate %38 by %c128_i32 dim 0 : vector<160x128xf32>, i32 -> vector<160x128xf32>
    %98 = vector.extract_strided_slice %97 {offsets = [0, 0], sizes = [128, 128], strides = [1, 1]} : vector<160x128xf32> to vector<128x128xf32>
    %99 = arith.truncf %98 : vector<128x128xf32> to vector<128x128xbf16>
    %c127_i32 = arith.constant 127 : i32
    %100 = tpu.dynamic_rotate %38 by %c127_i32 dim 0 : vector<160x128xf32>, i32 -> vector<160x128xf32>
    %101 = vector.extract_strided_slice %100 {offsets = [0, 0], sizes = [128, 128], strides = [1, 1]} : vector<160x128xf32> to vector<128x128xf32>
    %c15_i32_44 = arith.constant 15 : i32
    %102 = vector.broadcast %c15_i32_44 : i32 to vector<128x128xi32>
    %103 = arith.cmpi slt, %55, %102 : vector<128x128xi32>
    %cst_45 = arith.constant 0.000000e+00 : f32
    %104 = vector.broadcast %cst_45 : f32 to vector<128x128xf32>
    %105 = arith.select %103, %101, %104 : vector<128x128xi1>, vector<128x128xf32>
    %106 = arith.truncf %105 : vector<128x128xf32> to vector<128x128xbf16>
    %107 = tpu.concatenate %62, %65, %72, %79, %82, %89, %96, %99, %106 in 1 : vector<128x128xbf16>, vector<128x128xbf16>, vector<128x128xbf16>, vector<128x128xbf16>, vector<128x128xbf16>, vector<128x128xbf16>, vector<128x128xbf16>, vector<128x128xbf16>, vector<128x128xbf16> -> vector<128x1152xbf16>
    %c0_46 = arith.constant 0 : index
    %c0_47 = arith.constant 0 : index
    %108 = vector.load %arg9[%c0_46, %c0_47] : memref<1152x128xbf16, #tpu.memory_space<vmem>>, vector<1152x128xbf16>
    %cst_48 = arith.constant dense<0.000000e+00> : vector<128x128xf32>
    %109 = tpu.matmul %107, %108, %cst_48 {dimension_numbers = #tpu.dot_dimension_numbers<[1], [0], [0], [1], [0, 0, 1, 1], [], []>} : vector<128x1152xbf16>, vector<1152x128xbf16>, vector<128x128xf32> -> vector<128x128xf32>
    %c0_49 = arith.constant 0 : index
    %c0_50 = arith.constant 0 : index
    %110 = vector.load %arg10[%c0_49, %c0_50] : memref<1x128xf32, #tpu.memory_space<vmem>>, vector<1x128xf32>
    %111 = vector.broadcast %110 : vector<1x128xf32> to vector<128x128xf32>
    %112 = arith.addf %109, %111 : vector<128x128xf32>
    %cst_51 = arith.constant 0.000000e+00 : f32
    %113 = vector.broadcast %cst_51 : f32 to vector<128x128xf32>
    %114 = arith.maximumf %112, %113 : vector<128x128xf32>
    %115 = vector.shape_cast %37 : vector<128x128xf32> to vector<8x16x128xf32>
    %c0_52 = arith.constant 0 : index
    %c0_53 = arith.constant 0 : index
    %c0_54 = arith.constant 0 : index
    %c0_55 = arith.constant 0 : index
    %116 = vector.load %arg11[%c0_52, %c0_53, %c0_54, %c0_55] : memref<1x8x16x256xf32, #tpu.memory_space<vmem>>, vector<1x8x16x128xf32>
    %117 = vector.shape_cast %116 : vector<1x8x16x128xf32> to vector<8x16x128xf32>
    %118 = vector.shape_cast %115 : vector<8x16x128xf32> to vector<1x8x16x128xf32>
    tpu.vector_store %arg11[%c0_52, %c0_53, %c0_54, %c0_55], %118 {strides = array<i32>} : memref<1x8x16x256xf32, #tpu.memory_space<vmem>>, vector<1x8x16x128xf32>,
    %119 = vector.shape_cast %114 : vector<128x128xf32> to vector<8x16x128xf32>
    %c0_56 = arith.constant 0 : index
    %c0_57 = arith.constant 0 : index
    %c0_58 = arith.constant 0 : index
    %c128 = arith.constant 128 : index
    %120 = vector.load %arg11[%c0_56, %c0_57, %c0_58, %c128] : memref<1x8x16x256xf32, #tpu.memory_space<vmem>>, vector<1x8x16x128xf32>
    %121 = vector.shape_cast %120 : vector<1x8x16x128xf32> to vector<8x16x128xf32>
    %122 = vector.shape_cast %119 : vector<8x16x128xf32> to vector<1x8x16x128xf32>
    tpu.vector_store %arg11[%c0_56, %c0_57, %c0_58, %c128], %122 {strides = array<i32>} : memref<1x8x16x256xf32, #tpu.memory_space<vmem>>, vector<1x8x16x128xf32>,
    return
  }
  func.func @transform_0(%arg0: i32, %arg1: i32) -> (i32, i32, i32, i32) {
    %c0_i32 = arith.constant 0 : i32
    %c0_i32_0 = arith.constant 0 : i32
    %c0_i32_1 = arith.constant 0 : i32
    return %arg0, %arg1, %c0_i32, %c0_i32_0 : i32, i32, i32, i32
  }
  func.func @transform_1(%arg0: i32, %arg1: i32) -> (i32, i32, i32, i32) {
    %c8_i32 = arith.constant 8 : i32
    %0 = arith.muli %arg1, %c8_i32 : i32
    %c1_i32 = arith.constant 1 : i32
    %1 = arith.subi %0, %c1_i32 : i32
    %c0_i32 = arith.constant 0 : i32
    %2 = arith.maxsi %1, %c0_i32 : i32
    %c0_i32_0 = arith.constant 0 : i32
    %c0_i32_1 = arith.constant 0 : i32
    %c0_i32_2 = arith.constant 0 : i32
    return %arg0, %2, %c0_i32_0, %c0_i32_1 : i32, i32, i32, i32
  }
  func.func @transform_2(%arg0: i32, %arg1: i32) -> (i32, i32, i32, i32) {
    %c1_i32 = arith.constant 1 : i32
    %0 = arith.addi %arg1, %c1_i32 : i32
    %c8_i32 = arith.constant 8 : i32
    %1 = arith.muli %0, %c8_i32 : i32
    %c15_i32 = arith.constant 15 : i32
    %2 = arith.minsi %1, %c15_i32 : i32
    %c0_i32 = arith.constant 0 : i32
    %c0_i32_0 = arith.constant 0 : i32
    %c0_i32_1 = arith.constant 0 : i32
    return %arg0, %2, %c0_i32, %c0_i32_0 : i32, i32, i32, i32
  }
  func.func @transform_3(%arg0: i32, %arg1: i32) -> (i32, i32) {
    %c0_i32 = arith.constant 0 : i32
    %c0_i32_0 = arith.constant 0 : i32
    %c0_i32_1 = arith.constant 0 : i32
    return %c0_i32, %c0_i32_0 : i32, i32
  }
  func.func @transform_4(%arg0: i32, %arg1: i32) -> (i32, i32) {
    %c0_i32 = arith.constant 0 : i32
    %c0_i32_0 = arith.constant 0 : i32
    %c0_i32_1 = arith.constant 0 : i32
    return %c0_i32, %c0_i32_0 : i32, i32
  }
  func.func @transform_5(%arg0: i32, %arg1: i32) -> (i32, i32) {
    %c0_i32 = arith.constant 0 : i32
    %c0_i32_0 = arith.constant 0 : i32
    %c0_i32_1 = arith.constant 0 : i32
    return %c0_i32, %c0_i32_0 : i32, i32
  }
  func.func @transform_6(%arg0: i32, %arg1: i32) -> (i32, i32) {
    %c0_i32 = arith.constant 0 : i32
    %c0_i32_0 = arith.constant 0 : i32
    %c0_i32_1 = arith.constant 0 : i32
    return %c0_i32, %c0_i32_0 : i32, i32
  }
  func.func @transform_7(%arg0: i32, %arg1: i32) -> (i32, i32) {
    %c0_i32 = arith.constant 0 : i32
    %c0_i32_0 = arith.constant 0 : i32
    %c0_i32_1 = arith.constant 0 : i32
    return %c0_i32, %c0_i32_0 : i32, i32
  }
  func.func @transform_8(%arg0: i32, %arg1: i32) -> (i32, i32) {
    %c0_i32 = arith.constant 0 : i32
    %c0_i32_0 = arith.constant 0 : i32
    %c0_i32_1 = arith.constant 0 : i32
    return %c0_i32, %c0_i32_0 : i32, i32
  }
  func.func @transform_9(%arg0: i32, %arg1: i32) -> (i32, i32, i32, i32) {
    %c0_i32 = arith.constant 0 : i32
    %c0_i32_0 = arith.constant 0 : i32
    %c0_i32_1 = arith.constant 0 : i32
    return %arg0, %arg1, %c0_i32, %c0_i32_0 : i32, i32, i32, i32
  }
}

</mosaic_0001>

<llo_original>
// kernel: fire_forward.1
$region0: #{fire_forward.1}
  #allocation0 [shape = 'u32[]', space=smem, size = 0x4, offset = 0x4, fixed_abs, tag = 'smem constant byte address 0x4 - core index']
  #allocation1 [shape = 'u32[144,128]{1,0:T(1,128)}', space=vmem, size = 0x12000, scoped, tag = 'internal scratch']
  %s0 = inlined_call_operand.vmem [shape: bf16[2,16,16,128], index: 0, kind: input, shape index: {}, may-alias: {0,1,2}]
  %s1 = inlined_call_operand.vmem [shape: bf16[2,16,16,128], index: 1, kind: input, shape index: {}, may-alias: {0,1,2}]
  %s2 = inlined_call_operand.vmem [shape: bf16[2,16,16,128], index: 2, kind: input, shape index: {}, may-alias: {0,1,2}]
  %s3 = inlined_call_operand.vmem [shape: bf16[128,128], index: 3, kind: input, shape index: {}]
  %s4 = inlined_call_operand.vmem [shape: f32[1,128], index: 4, kind: input, shape index: {}]
  %s5 = inlined_call_operand.vmem [shape: bf16[128,128], index: 5, kind: input, shape index: {}]
  %s6 = inlined_call_operand.vmem [shape: f32[1,128], index: 6, kind: input, shape index: {}]
  %s7 = inlined_call_operand.vmem [shape: bf16[1152,128], index: 7, kind: input, shape index: {}]
  %s8 = inlined_call_operand.vmem [shape: f32[1,128], index: 8, kind: input, shape index: {}]
  %s9 = inlined_call_operand.vmem [shape: f32[2,16,16,256], index: 9, kind: output, shape index: {}]
  %s10 = sld [smem:[#allocation0]]
  $region69: #{fire_forward.1} parent=0
    _
  %s12 = ssub.s32 1, %s10
  %s13 = scalar_select 0, %s12, %s10
  loop: start=0, step=1, limit=6
  $region2: #{fire_forward.1} parent=0 // loop_pre_header
    _
  $region3: #{fire_forward.1} parent=0 // loop_header
    %s15 = sphi 0, %s19
    %p16 = scmp.ge.s32.totalorder %s15, 6
    %s22 = sphi 0, %s34
    %s23 = sphi 0, %s30
    %s24 = sphi 0, %s22
    %s25 = sphi 0, %s23
    %s26 = sphi 0, %s24
    %s27 = sphi 0, %s25
    %s39 = sphi 0, %s41
    %s42 = sphi 0, %s39
    %s43 = sphi 0, %s42
    %s59 = sphi 0, %s43
    %s75 = sphi 0, %s77
    %s78 = sphi 0, %s75
    %s79 = sphi 0, %s78
    %s95 = sphi 0, %s79
    %s111 = sphi 0, %s113
    %s114 = sphi 0, %s111
    %s115 = sphi 0, %s114
    %s131 = sphi 0, %s115
    %s135 = sphi 0, %s135
    %s137 = sphi 0, %s135
    %s138 = sphi 0, %s137
    %s152 = sphi 0, %s138
    %s156 = sphi 0, %s156
    %s158 = sphi 0, %s156
    %s159 = sphi 0, %s158
    %s173 = sphi 0, %s159
    %s177 = sphi 0, %s177
    %s179 = sphi 0, %s177
    %s180 = sphi 0, %s179
    %s194 = sphi 0, %s180
    %s198 = sphi 0, %s198
    %s200 = sphi 0, %s198
    %s201 = sphi 0, %s200
    %s215 = sphi 0, %s201
    %s219 = sphi 0, %s219
    %s221 = sphi 0, %s219
    %s222 = sphi 0, %s221
    %s236 = sphi 0, %s222
    %s240 = sphi 0, %s240
    %s242 = sphi 0, %s240
    %s243 = sphi 0, %s242
    %s257 = sphi 0, %s243
    %s265 = sphi 0, %s267
    %s268 = sphi 0, %s265
    %s269 = sphi 0, %s268
    %s285 = sphi 0, %s269
  $region4: #{fire_forward.1} parent=0 // loop_header_branch
    %18 = sbr.rel (%p16) target = $region8
  $region5: #{fire_forward.1} parent=0 // loop_body
    %s20 = ssub.s32 %s15, 1
    %s21 = ssub.s32 %s15, 2
    %s28 = sadd.s32 1, %s23
    %p29 = scmp.ge.s32.totalorder %s28, 2
    %s30 = scalar_select %p29, 0, %s28
    %s31 = sadd.s32 1, %s22
    %s32 = scalar_select %p29, %s31, %s22
    %p33 = scmp.ge.s32.totalorder %s32, 2
    %s34 = scalar_select %p33, 0, %s32
    %s35 = ssub.s32 %s22, %s34
    %s36 = ssub.s32 %s23, %s30
    %s37 = sor.u32 %s35, %s36
    %p38 = scmp.eq.s32.totalorder %s37, 0
    %s40 = sadd.s32 %s39, 1
    %s41 = scalar_select %p38, %s39, %s40
    %p44 = pneg %p38
    %p45 = scmp.eq.s32.totalorder %s15, 3
    %p46 = por %p44, %p45
    %p47 = scmp.ne.s32.totalorder %s39, %s42
    %p48 = scmp.eq.s32.totalorder %s15, 0
    %p49 = por %p47, %p48
    %p50 = scmp.ne.s32.totalorder %s39, %s42
    %p51 = scmp.eq.s32.totalorder %s20, 3
    %p52 = por %p50, %p51
    %p53 = scmp.ne.s32.totalorder %s42, %s43
    %p54 = scmp.eq.s32.totalorder %s20, 0
    %p55 = por %p53, %p54
    %p56 = scmp.ne.s32.totalorder %s42, %s43
    %p57 = scmp.eq.s32.totalorder %s21, 3
    %p58 = por %p56, %p57
    %p60 = scmp.ne.s32.totalorder %s43, %s59
    %p61 = scmp.eq.s32.totalorder %s21, 0
    %p62 = por %p60, %p61
    %s63 = smul.u32 %s23, 8
    %s64 = ssub.s32 %s63, 1
    %p65 = scmp.gt.s32.totalorder %s64, 0
    %s66 = scalar_select %p65, %s64, 0
    %s67 = smul.u32 %s30, 8
    %s68 = ssub.s32 %s67, 1
    %p69 = scmp.gt.s32.totalorder %s68, 0
    %s70 = scalar_select %p69, %s68, 0
    %s71 = ssub.s32 %s22, %s34
    %s72 = ssub.s32 %s66, %s70
    %s73 = sor.u32 %s71, %s72
    %p74 = scmp.eq.s32.totalorder %s73, 0
    %s76 = sadd.s32 %s75, 1
    %s77 = scalar_select %p74, %s75, %s76
    %p80 = pneg %p74
    %p81 = scmp.eq.s32.totalorder %s15, 3
    %p82 = por %p80, %p81
    %p83 = scmp.ne.s32.totalorder %s75, %s78
    %p84 = scmp.eq.s32.totalorder %s15, 0
    %p85 = por %p83, %p84
    %p86 = scmp.ne.s32.totalorder %s75, %s78
    %p87 = scmp.eq.s32.totalorder %s20, 3
    %p88 = por %p86, %p87
    %p89 = scmp.ne.s32.totalorder %s78, %s79
    %p90 = scmp.eq.s32.totalorder %s20, 0
    %p91 = por %p89, %p90
    %p92 = scmp.ne.s32.totalorder %s78, %s79
    %p93 = scmp.eq.s32.totalorder %s21, 3
    %p94 = por %p92, %p93
    %p96 = scmp.ne.s32.totalorder %s79, %s95
    %p97 = scmp.eq.s32.totalorder %s21, 0
    %p98 = por %p96, %p97
    %s99 = sadd.s32 %s23, 1
    %s100 = smul.u32 %s99, 8
    %p101 = scmp.lt.s32.totalorder %s100, 15
    %s102 = scalar_select %p101, %s100, 15
    %s103 = sadd.s32 %s30, 1
    %s104 = smul.u32 %s103, 8
    %p105 = scmp.lt.s32.totalorder %s104, 15
    %s106 = scalar_select %p105, %s104, 15
    %s107 = ssub.s32 %s22, %s34
    %s108 = ssub.s32 %s102, %s106
    %s109 = sor.u32 %s107, %s108
    %p110 = scmp.eq.s32.totalorder %s109, 0
    %s112 = sadd.s32 %s111, 1
    %s113 = scalar_select %p110, %s111, %s112
    %p116 = pneg %p110
    %p117 = scmp.eq.s32.totalorder %s15, 3
    %p118 = por %p116, %p117
    %p119 = scmp.ne.s32.totalorder %s111, %s114
    %p120 = scmp.eq.s32.totalorder %s15, 0
    %p121 = por %p119, %p120
    %p122 = scmp.ne.s32.totalorder %s111, %s114
    %p123 = scmp.eq.s32.totalorder %s20, 3
    %p124 = por %p122, %p123
    %p125 = scmp.ne.s32.totalorder %s114, %s115
    %p126 = scmp.eq.s32.totalorder %s20, 0
    %p127 = por %p125, %p126
    %p128 = scmp.ne.s32.totalorder %s114, %s115
    %p129 = scmp.eq.s32.totalorder %s21, 3
    %p130 = por %p128, %p129
    %p132 = scmp.ne.s32.totalorder %s115, %s131
    %p133 = scmp.eq.s32.totalorder %s21, 0
    %p134 = por %p132, %p133
    %s136 = sadd.s32 %s135, 1
    %p139 = scmp.eq.s32.totalorder %s15, 3
    %p140 = scmp.ne.s32.totalorder %s135, %s137
    %p141 = scmp.eq.s32.totalorder %s15, 0
    %p142 = por %p140, %p141
    %p143 = scmp.ne.s32.totalorder %s135, %s137
    %p144 = scmp.eq.s32.totalorder %s20, 3
    %p145 = por %p143, %p144
    %p146 = scmp.ne.s32.totalorder %s137, %s138
    %p147 = scmp.eq.s32.totalorder %s20, 0
    %p148 = por %p146, %p147
    %p149 = scmp.ne.s32.totalorder %s137, %s138
    %p150 = scmp.eq.s32.totalorder %s21, 3
    %p151 = por %p149, %p150
    %p153 = scmp.ne.s32.totalorder %s138, %s152
    %p154 = scmp.eq.s32.totalorder %s21, 0
    %p155 = por %p153, %p154
    %s157 = sadd.s32 %s156, 1
    %p160 = scmp.eq.s32.totalorder %s15, 3
    %p161 = scmp.ne.s32.totalorder %s156, %s158
    %p162 = scmp.eq.s32.totalorder %s15, 0
    %p163 = por %p161, %p162
    %p164 = scmp.ne.s32.totalorder %s156, %s158
    %p165 = scmp.eq.s32.totalorder %s20, 3
    %p166 = por %p164, %p165
    %p167 = scmp.ne.s32.totalorder %s158, %s159
    %p168 = scmp.eq.s32.totalorder %s20, 0
    %p169 = por %p167, %p168
    %p170 = scmp.ne.s32.totalorder %s158, %s159
    %p171 = scmp.eq.s32.totalorder %s21, 3
    %p172 = por %p170, %p171
    %p174 = scmp.ne.s32.totalorder %s159, %s173
    %p175 = scmp.eq.s32.totalorder %s21, 0
    %p176 = por %p174, %p175
    %s178 = sadd.s32 %s177, 1
    %p181 = scmp.eq.s32.totalorder %s15, 3
    %p182 = scmp.ne.s32.totalorder %s177, %s179
    %p183 = scmp.eq.s32.totalorder %s15, 0
    %p184 = por %p182, %p183
    %p185 = scmp.ne.s32.totalorder %s177, %s179
    %p186 = scmp.eq.s32.totalorder %s20, 3
    %p187 = por %p185, %p186
    %p188 = scmp.ne.s32.totalorder %s179, %s180
    %p189 = scmp.eq.s32.totalorder %s20, 0
    %p190 = por %p188, %p189
    %p191 = scmp.ne.s32.totalorder %s179, %s180
    %p192 = scmp.eq.s32.totalorder %s21, 3
    %p193 = por %p191, %p192
    %p195 = scmp.ne.s32.totalorder %s180, %s194
    %p196 = scmp.eq.s32.totalorder %s21, 0
    %p197 = por %p195, %p196
    %s199 = sadd.s32 %s198, 1
    %p202 = scmp.eq.s32.totalorder %s15, 3
    %p203 = scmp.ne.s32.totalorder %s198, %s200
    %p204 = scmp.eq.s32.totalorder %s15, 0
    %p205 = por %p203, %p204
    %p206 = scmp.ne.s32.totalorder %s198, %s200
    %p207 = scmp.eq.s32.totalorder %s20, 3
    %p208 = por %p206, %p207
    %p209 = scmp.ne.s32.totalorder %s200, %s201
    %p210 = scmp.eq.s32.totalorder %s20, 0
    %p211 = por %p209, %p210
    %p212 = scmp.ne.s32.totalorder %s200, %s201
    %p213 = scmp.eq.s32.totalorder %s21, 3
    %p214 = por %p212, %p213
    %p216 = scmp.ne.s32.totalorder %s201, %s215
    %p217 = scmp.eq.s32.totalorder %s21, 0
    %p218 = por %p216, %p217
    %s220 = sadd.s32 %s219, 1
    %p223 = scmp.eq.s32.totalorder %s15, 3
    %p224 = scmp.ne.s32.totalorder %s219, %s221
    %p225 = scmp.eq.s32.totalorder %s15, 0
    %p226 = por %p224, %p225
    %p227 = scmp.ne.s32.totalorder %s219, %s221
    %p228 = scmp.eq.s32.totalorder %s20, 3
    %p229 = por %p227, %p228
    %p230 = scmp.ne.s32.totalorder %s221, %s222
    %p231 = scmp.eq.s32.totalorder %s20, 0
    %p232 = por %p230, %p231
    %p233 = scmp.ne.s32.totalorder %s221, %s222
    %p234 = scmp.eq.s32.totalorder %s21, 3
    %p235 = por %p233, %p234
    %p237 = scmp.ne.s32.totalorder %s222, %s236
    %p238 = scmp.eq.s32.totalorder %s21, 0
    %p239 = por %p237, %p238
    %s241 = sadd.s32 %s240, 1
    %p244 = scmp.eq.s32.totalorder %s15, 3
    %p245 = scmp.ne.s32.totalorder %s240, %s242
    %p246 = scmp.eq.s32.totalorder %s15, 0
    %p247 = por %p245, %p246
    %p248 = scmp.ne.s32.totalorder %s240, %s242
    %p249 = scmp.eq.s32.totalorder %s20, 3
    %p250 = por %p248, %p249
    %p251 = scmp.ne.s32.totalorder %s242, %s243
    %p252 = scmp.eq.s32.totalorder %s20, 0
    %p253 = por %p251, %p252
    %p254 = scmp.ne.s32.totalorder %s242, %s243
    %p255 = scmp.eq.s32.totalorder %s21, 3
    %p256 = por %p254, %p255
    %p258 = scmp.ne.s32.totalorder %s243, %s257
    %p259 = scmp.eq.s32.totalorder %s21, 0
    %p260 = por %p258, %p259
    %s261 = ssub.s32 %s22, %s34
    %s262 = ssub.s32 %s23, %s30
    %s263 = sor.u32 %s261, %s262
    %p264 = scmp.eq.s32.totalorder %s263, 0
    %s266 = sadd.s32 %s265, 1
    %s267 = scalar_select %p264, %s265, %s266
    %p270 = pneg %p264
    %p271 = scmp.eq.s32.totalorder %s15, 3
    %p272 = por %p270, %p271
    %p273 = scmp.ne.s32.totalorder %s265, %s268
    %p274 = scmp.eq.s32.totalorder %s15, 0
    %p275 = por %p273, %p274
    %p276 = scmp.ne.s32.totalorder %s265, %s268
    %p277 = scmp.eq.s32.totalorder %s20, 3
    %p278 = por %p276, %p277
    %p279 = scmp.ne.s32.totalorder %s268, %s269
    %p280 = scmp.eq.s32.totalorder %s20, 0
    %p281 = por %p279, %p280
    %p282 = scmp.ne.s32.totalorder %s268, %s269
    %p283 = scmp.eq.s32.totalorder %s21, 3
    %p284 = por %p282, %p283
    %p286 = scmp.ne.s32.totalorder %s269, %s285
    %p287 = scmp.eq.s32.totalorder %s21, 0
    %p288 = por %p286, %p287
    %p289 = scmp.le.s32.totalorder 1, %s15
    %p290 = scmp.lt.s32.totalorder %s15, 5
    %p291 = pnand %p289, %p290
    %p292 = pneg %p291
    // Predicated region
    $region9: #{fire_forward.1} parent=5 // pred_check
      _
    $region10: #{fire_forward.1} parent=5 // pred_check_branch
      %294 = sbr.rel (%p291) target = $region12
    $region11: #{fire_forward.1} parent=5 // pred_region
      %s295 = ssub.s32 %s15, 1
      // Predicated region
      $region13: #{fire_forward.1} parent=11 // pred_check
        %p296 = pneg %p148
      $region14: #{fire_forward.1} parent=11 // pred_check_branch
        %298 = sbr.rel (%p296) target = $region16
      $region15: #{fire_forward.1} parent=11 // pred_region
        _
      $region16: #{fire_forward.1} parent=11 // pred_fallthru
        _
      // Predicated region
      $region17: #{fire_forward.1} parent=11 // pred_check
        %p299 = pneg %p169
      $region18: #{fire_forward.1} parent=11 // pred_check_branch
        %301 = sbr.rel (%p299) target = $region20
      $region19: #{fire_forward.1} parent=11 // pred_region
        _
      $region20: #{fire_forward.1} parent=11 // pred_fallthru
        _
      // Predicated region
      $region21: #{fire_forward.1} parent=11 // pred_check
        %p302 = pneg %p190
      $region22: #{fire_forward.1} parent=11 // pred_check_branch
        %304 = sbr.rel (%p302) target = $region24
      $region23: #{fire_forward.1} parent=11 // pred_region
        _
      $region24: #{fire_forward.1} parent=11 // pred_fallthru
        _
      // Predicated region
      $region25: #{fire_forward.1} parent=11 // pred_check
        %p305 = pneg %p211
      $region26: #{fire_forward.1} parent=11 // pred_check_branch
        %307 = sbr.rel (%p305) target = $region28
      $region27: #{fire_forward.1} parent=11 // pred_region
        _
      $region28: #{fire_forward.1} parent=11 // pred_fallthru
        _
      // Predicated region
      $region29: #{fire_forward.1} parent=11 // pred_check
        %p308 = pneg %p232
      $region30: #{fire_forward.1} parent=11 // pred_check_branch
        %310 = sbr.rel (%p308) target = $region32
      $region31: #{fire_forward.1} parent=11 // pred_region
        _
      $region32: #{fire_forward.1} parent=11 // pred_fallthru
        _
      // Predicated region
      $region33: #{fire_forward.1} parent=11 // pred_check
        %p311 = pneg %p253
      $region34: #{fire_forward.1} parent=11 // pred_check_branch
        %313 = sbr.rel (%p311) target = $region36
      $region35: #{fire_forward.1} parent=11 // pred_region
        _
      $region36: #{fire_forward.1} parent=11 // pred_fallthru
        _
    $region12: #{fire_forward.1} parent=5 // pred_fallthru
      _
    %p314 = scmp.lt.s32.totalorder %s15, 4
    // Predicated region
    $region37: #{fire_forward.1} parent=5 // pred_check
      %p315 = pneg %p314
    $region38: #{fire_forward.1} parent=5 // pred_check_branch
      %317 = sbr.rel (%p315) target = $region40
    $region39: #{fire_forward.1} parent=5 // pred_region
      // Predicated region
      $region41: #{fire_forward.1} parent=39 // pred_check
        %p318 = pneg %p49
      $region42: #{fire_forward.1} parent=39 // pred_check_branch
        %320 = sbr.rel (%p318) target = $region44
      $region43: #{fire_forward.1} parent=39 // pred_region
        %s321 = smul.u32 8, %s23
        %p322 = scmp.lt.s32.totalorder %s22, 1
        %s323 = scalar_select %p322, %s22, 1
        %p324 = scmp.lt.s32.totalorder %s321, 15
        %s325 = scalar_select %p324, %s321, 15
        %s326 = smul.addr %s325, 2
        %s327 = smul.addr %s323, 32
        %s328 = sadd.s32 %s326, %s327
        %s329 = smul.addr %s328, 4
        %s330 = scalar_lea.vmem %s0, %s329
        %s331 = smul.u32 8, %s23
      $region44: #{fire_forward.1} parent=39 // pred_fallthru
        _
      // Predicated region
      $region45: #{fire_forward.1} parent=39 // pred_check
        %p332 = pneg %p85
      $region46: #{fire_forward.1} parent=39 // pred_check_branch
        %334 = sbr.rel (%p332) target = $region48
      $region47: #{fire_forward.1} parent=39 // pred_region
        %s335 = smul.u32 %s23, 8
        %s336 = ssub.s32 %s335, 1
        %p337 = scmp.gt.s32.totalorder %s336, 0
        %s338 = scalar_select %p337, %s336, 0
        %p339 = scmp.lt.s32.totalorder %s22, 1
        %s340 = scalar_select %p339, %s22, 1
        %p341 = scmp.lt.s32.totalorder %s338, 15
        %s342 = scalar_select %p341, %s338, 15
        %s343 = smul.addr %s342, 2
        %s344 = smul.addr %s340, 32
        %s345 = sadd.s32 %s343, %s344
        %s346 = smul.addr %s345, 4
        %s347 = scalar_lea.vmem %s1, %s346
        %s348 = smul.u32 %s23, 8
        %s349 = ssub.s32 %s348, 1
        %p350 = scmp.gt.s32.totalorder %s349, 0
        %s351 = scalar_select %p350, %s349, 0
      $region48: #{fire_forward.1} parent=39 // pred_fallthru
        _
      // Predicated region
      $region49: #{fire_forward.1} parent=39 // pred_check
        %p352 = pneg %p121
      $region50: #{fire_forward.1} parent=39 // pred_check_branch
        %354 = sbr.rel (%p352) target = $region52
      $region51: #{fire_forward.1} parent=39 // pred_region
        %s355 = sadd.s32 %s23, 1
        %s356 = smul.u32 %s355, 8
        %p357 = scmp.lt.s32.totalorder %s356, 15
        %s358 = scalar_select %p357, %s356, 15
        %p359 = scmp.lt.s32.totalorder %s22, 1
        %s360 = scalar_select %p359, %s22, 1
        %p361 = scmp.lt.s32.totalorder %s358, 15
        %s362 = scalar_select %p361, %s358, 15
        %s363 = smul.addr %s362, 2
        %s364 = smul.addr %s360, 32
        %s365 = sadd.s32 %s363, %s364
        %s366 = smul.addr %s365, 4
        %s367 = scalar_lea.vmem %s2, %s366
        %s368 = sadd.s32 %s23, 1
        %s369 = smul.u32 %s368, 8
        %p370 = scmp.lt.s32.totalorder %s369, 15
        %s371 = scalar_select %p370, %s369, 15
      $region52: #{fire_forward.1} parent=39 // pred_fallthru
        _
    $region40: #{fire_forward.1} parent=5 // pred_fallthru
      _
    %p372 = scmp.le.s32.totalorder 1, %s15
    %p373 = scmp.lt.s32.totalorder %s15, 5
    %p374 = pnand %p372, %p373
    %p375 = pneg %p374
    // Predicated region
    $region53: #{fire_forward.1} parent=5 // pred_check
      _
    $region54: #{fire_forward.1} parent=5 // pred_check_branch
      %377 = sbr.rel (%p374) target = $region56
    $region55: #{fire_forward.1} parent=5 // pred_region
      %s378 = ssub.s32 %s15, 1
      %s379 = smul.u32 8, %s25
      %p380 = scmp.lt.s32.totalorder %s24, 1
      %s381 = scalar_select %p380, %s24, 1
      %p382 = scmp.lt.s32.totalorder %s379, 15
      %s383 = scalar_select %p382, %s379, 15
      %s384 = smul.addr %s383, 2
      %s385 = smul.addr %s381, 32
      %s386 = sadd.s32 %s384, %s385
      %s387 = smul.addr %s386, 4
      %s388 = scalar_lea.vmem %s0, %s387
      %p389 = pneg %p55
      %p390 = pneg %p52
      %s391 = smul.u32 %s25, 8
      %s392 = ssub.s32 %s391, 1
      %p393 = scmp.gt.s32.totalorder %s392, 0
      %s394 = scalar_select %p393, %s392, 0
      %p395 = scmp.lt.s32.totalorder %s24, 1
      %s396 = scalar_select %p395, %s24, 1
      %p397 = scmp.lt.s32.totalorder %s394, 15
      %s398 = scalar_select %p397, %s394, 15
      %s399 = smul.addr %s398, 2
      %s400 = smul.addr %s396, 32
      %s401 = sadd.s32 %s399, %s400
      %s402 = smul.addr %s401, 4
      %s403 = scalar_lea.vmem %s1, %s402
      %p404 = pneg %p91
      %p405 = pneg %p88
      %s406 = sadd.s32 %s25, 1
      %s407 = smul.u32 %s406, 8
      %p408 = scmp.lt.s32.totalorder %s407, 15
      %s409 = scalar_select %p408, %s407, 15
      %p410 = scmp.lt.s32.totalorder %s24, 1
      %s411 = scalar_select %p410, %s24, 1
      %p412 = scmp.lt.s32.totalorder %s409, 15
      %s413 = scalar_select %p412, %s409, 15
      %s414 = smul.addr %s413, 2
      %s415 = smul.addr %s411, 32
      %s416 = sadd.s32 %s414, %s415
      %s417 = smul.addr %s416, 4
      %s418 = scalar_lea.vmem %s2, %s417
      %p419 = pneg %p127
      %p420 = pneg %p124
      %p421 = pneg %p148
      %p422 = pneg %p145
      %p423 = pneg %p169
      %p424 = pneg %p166
      %p425 = pneg %p190
      %p426 = pneg %p187
      %p427 = pneg %p211
      %p428 = pneg %p208
      %p429 = pneg %p232
      %p430 = pneg %p229
      %p431 = pneg %p253
      %p432 = pneg %p250
      %p433 = pneg %p281
      %p434 = pneg %p278
      %s435 = smul.u32 8, %s25
      %p436 = scmp.lt.s32.totalorder %s24, 1
      %s437 = scalar_select %p436, %s24, 1
      %p438 = scmp.lt.s32.totalorder %s435, 15
      %s439 = scalar_select %p438, %s435, 15
      %s440 = smul.addr %s439, 4
      %s441 = smul.addr %s437, 64
      %s442 = sadd.s32 %s440, %s441
      %s443 = smul.addr %s442, 8
      %s444 = scalar_lea.vmem %s9, %s443
      %s445 = smul.u32 8, %s25
      %p446 = scmp.lt.s32.totalorder %s24, 1
      %s447 = scalar_select %p446, %s24, 1
      %p448 = scmp.lt.s32.totalorder %s445, 15
      %s449 = scalar_select %p448, %s445, 15
      %s450 = smul.addr %s449, 2
      %s451 = smul.addr %s447, 32
      %s452 = sadd.s32 %s450, %s451
      %s453 = smul.addr %s452, 4
      %s454 = scalar_lea.vmem %s0, %s453
      %s455 = smul.u32 8, %s25
      %s456 = smul.u32 %s25, 8
      %s457 = ssub.s32 %s456, 1
      %p458 = scmp.gt.s32.totalorder %s457, 0
      %s459 = scalar_select %p458, %s457, 0
      %p460 = scmp.lt.s32.totalorder %s24, 1
      %s461 = scalar_select %p460, %s24, 1
      %p462 = scmp.lt.s32.totalorder %s459, 15
      %s463 = scalar_select %p462, %s459, 15
      %s464 = smul.addr %s463, 2
      %s465 = smul.addr %s461, 32
      %s466 = sadd.s32 %s464, %s465
      %s467 = smul.addr %s466, 4
      %s468 = scalar_lea.vmem %s1, %s467
      %s469 = smul.u32 %s25, 8
      %s470 = ssub.s32 %s469, 1
      %p471 = scmp.gt.s32.totalorder %s470, 0
      %s472 = scalar_select %p471, %s470, 0
      %s473 = sadd.s32 %s25, 1
      %s474 = smul.u32 %s473, 8
      %p475 = scmp.lt.s32.totalorder %s474, 15
      %s476 = scalar_select %p475, %s474, 15
      %p477 = scmp.lt.s32.totalorder %s24, 1
      %s478 = scalar_select %p477, %s24, 1
      %p479 = scmp.lt.s32.totalorder %s476, 15
      %s480 = scalar_select %p479, %s476, 15
      %s481 = smul.addr %s480, 2
      %s482 = smul.addr %s478, 32
      %s483 = sadd.s32 %s481, %s482
      %s484 = smul.addr %s483, 4
      %s485 = scalar_lea.vmem %s2, %s484
      %s486 = sadd.s32 %s25, 1
      %s487 = smul.u32 %s486, 8
      %p488 = scmp.lt.s32.totalorder %s487, 15
      %s489 = scalar_select %p488, %s487, 15
      %s490 = smul.u32 8, %s25
      %p491 = scmp.lt.s32.totalorder %s24, 1
      %s492 = scalar_select %p491, %s24, 1
      %p493 = scmp.lt.s32.totalorder %s490, 15
      %s494 = scalar_select %p493, %s490, 15
      %s495 = smul.addr %s494, 4
      %s496 = smul.addr %s492, 64
      %s497 = sadd.s32 %s495, %s496
      %s498 = smul.addr %s497, 8
      %s499 = scalar_lea.vmem %s9, %s498
      %s500 = smul.u32 8, %s25
      %v502 = vld [vmem:[%s454] sm:$0xf]
      %v503 = vld [vmem:[%s454 + $0x4] sm:$0xf]
      %v504 = vld [vmem:[%s454 + $0x8] sm:$0xf]
      %v505 = vld [vmem:[%s454 + $0xc] sm:$0xf]
      %v506 = vld [vmem:[%s454 + $0x10] sm:$0xf]
      %v507 = vld [vmem:[%s454 + $0x14] sm:$0xf]
      %v508 = vld [vmem:[%s454 + $0x18] sm:$0xf]
      %v509 = vld [vmem:[%s454 + $0x1c] sm:$0xf]
      %v510 = vld [vmem:[%s454 + $0x20] sm:$0xf]
      %v511 = vld [vmem:[%s454 + $0x24] sm:$0xf]
      %v512 = vld [vmem:[%s454 + $0x28] sm:$0xf]
      %v513 = vld [vmem:[%s454 + $0x2c] sm:$0xf]
      %v514 = vld [vmem:[%s454 + $0x30] sm:$0xf]
      %v515 = vld [vmem:[%s454 + $0x34] sm:$0xf]
      %v516 = vld [vmem:[%s454 + $0x38] sm:$0xf]
      %v517 = vld [vmem:[%s454 + $0x3c] sm:$0xf]
      %v518 = vld [vmem:[%s468] sm:$0xf]
      %v519 = vld [vmem:[%s468 + $0x4] sm:$0xf]
      %v520 = vld [vmem:[%s485] sm:$0xf]
      %v521 = vld [vmem:[%s485 + $0x4] sm:$0xf]
      %v522 = vld [vmem:[%s3] sm:$0xf]
      %v523 = vld [vmem:[%s3 + $0x4] sm:$0xf]
      %v524 = vld [vmem:[%s3 + $0x8] sm:$0xf]
      %v525 = vld [vmem:[%s3 + $0xc] sm:$0xf]
      %v526 = vld [vmem:[%s3 + $0x10] sm:$0xf]
      %v527 = vld [vmem:[%s3 + $0x14] sm:$0xf]
      %v528 = vld [vmem:[%s3 + $0x18] sm:$0xf]
      %v529 = vld [vmem:[%s3 + $0x1c] sm:$0xf]
      %v530 = vld [vmem:[%s3 + $0x20] sm:$0xf]
      %v531 = vld [vmem:[%s3 + $0x24] sm:$0xf]
      %v532 = vld [vmem:[%s3 + $0x28] sm:$0xf]
      %v533 = vld [vmem:[%s3 + $0x2c] sm:$0xf]
      %v534 = vld [vmem:[%s3 + $0x30] sm:$0xf]
      %v535 = vld [vmem:[%s3 + $0x34] sm:$0xf]
      %v536 = vld [vmem:[%s3 + $0x38] sm:$0xf]
      %v537 = vld [vmem:[%s3 + $0x3c] sm:$0xf]
      %v538 = vld [vmem:[%s4] sm:$0x1]
      %v540 = vlaneseq
      %v541 = vshrl.u32 %v540, 7
      %v542 = vsub.s32 0, %v541
      %v543 = vrot.slane %v538, %v542
      %v561 = vunpack.c.l.b16 %v502
      %v562 = vunpack.c.l.b16 %v503
      %v563 = vunpack.c.l.b16 %v504
      %v564 = vunpack.c.l.b16 %v505
      %v565 = vunpack.c.l.b16 %v506
      %v566 = vunpack.c.l.b16 %v507
      %v567 = vunpack.c.l.b16 %v508
      %v568 = vunpack.c.l.b16 %v509
      %v569 = vunpack.c.l.b16 %v510
      %v570 = vunpack.c.l.b16 %v511
      %v571 = vunpack.c.l.b16 %v512
      %v572 = vunpack.c.l.b16 %v513
      %v573 = vunpack.c.l.b16 %v514
      %v574 = vunpack.c.l.b16 %v515
      %v575 = vunpack.c.l.b16 %v516
      %v576 = vunpack.c.l.b16 %v517
      %v577 = vpack.c.b16 %v562, %v561
      %v578 = vpack.c.b16 %v564, %v563
      %v579 = vpack.c.b16 %v566, %v565
      %v580 = vpack.c.b16 %v568, %v567
      %v581 = vpack.c.b16 %v570, %v569
      %v582 = vpack.c.b16 %v572, %v571
      %v583 = vpack.c.b16 %v574, %v573
      %v584 = vpack.c.b16 %v576, %v575
      %v609 = vunpack.c.l.b16 %v522
      %v610 = vunpack.c.l.b16 %v523
      %v611 = vunpack.c.l.b16 %v524
      %v612 = vunpack.c.l.b16 %v525
      %v613 = vunpack.c.l.b16 %v526
      %v614 = vunpack.c.l.b16 %v527
      %v615 = vunpack.c.l.b16 %v528
      %v616 = vunpack.c.l.b16 %v529
      %v617 = vunpack.c.l.b16 %v530
      %v618 = vunpack.c.l.b16 %v531
      %v619 = vunpack.c.l.b16 %v532
      %v620 = vunpack.c.l.b16 %v533
      %v621 = vunpack.c.l.b16 %v534
      %v622 = vunpack.c.l.b16 %v535
      %v623 = vunpack.c.l.b16 %v536
      %v624 = vunpack.c.l.b16 %v537
      %v625 = vpack.c.b16 %v610, %v609
      %v626 = vpack.c.b16 %v612, %v611
      %v627 = vpack.c.b16 %v614, %v613
      %v628 = vpack.c.b16 %v616, %v615
      %v629 = vpack.c.b16 %v618, %v617
      %v630 = vpack.c.b16 %v620, %v619
      %v631 = vpack.c.b16 %v622, %v621
      %v632 = vpack.c.b16 %v624, %v623
      %641 = vmatprep.subr.bf16.mxu0 0
      %642 = vmatpush1.bf16.msra.mxu0 %v625
      %643 = vmatprep.subr.bf16.mxu0 0
      %644 = vmatpush1.bf16.msra.mxu0 %v626
      %645 = vmatprep.subr.bf16.mxu0 0
      %646 = vmatpush1.bf16.msra.mxu0 %v627
      %647 = vmatprep.subr.bf16.mxu0 0
      %648 = vmatpush1.bf16.msra.mxu0 %v628
      %649 = vmatprep.subr.bf16.mxu0 0
      %650 = vmatpush1.bf16.msra.mxu0 %v629
      %651 = vmatprep.subr.bf16.mxu0 0
      %652 = vmatpush1.bf16.msra.mxu0 %v630
      %653 = vmatprep.subr.bf16.mxu0 0
      %654 = vmatpush1.bf16.msra.mxu0 %v631
      %655 = vmatprep.subr.bf16.mxu0 0
      %656 = vmatpush1.bf16.msra.mxu0 %v632
      %657 = vmatprep.subr.bf16.mxu0 0
      %658 = vmatpush1.bf16.msra.mxu0 0
      %659 = vmatprep.subr.bf16.mxu0 0
      %660 = vmatpush1.bf16.msra.mxu0 0
      %661 = vmatprep.subr.bf16.mxu0 0
      %662 = vmatpush1.bf16.msra.mxu0 0
      %663 = vmatprep.subr.bf16.mxu0 0
      %664 = vmatpush1.bf16.msra.mxu0 0
      %665 = vmatprep.subr.bf16.mxu0 0
      %666 = vmatpush1.bf16.msra.mxu0 0
      %667 = vmatprep.subr.bf16.mxu0 0
      %668 = vmatpush1.bf16.msra.mxu0 0
      %669 = vmatprep.subr.bf16.mxu0 0
      %670 = vmatpush1.bf16.msra.mxu0 0
      %671 = vmatprep.subr.bf16.mxu0 0
      %672 = vmatpush1.bf16.msra.mxu0 0
      %673 = vmatprep.mubr.bf16.mxu0 0
      %674 = vmatmul.mubr.bf16.gmra.mrb[0].mxu0 %v577
      %v675 = vpop.f32.mrb[0].mxu0
      %v676 = vadd.f32 %v543, %v675
      %v677 = vpop.f32.mrb[0].mxu0
      %v678 = vpop.f32.mrb[0].mxu0
      %v679 = vadd.f32 %v543, %v678
      %v680 = vpop.f32.mrb[0].mxu0
      %681 = vmatprep.mubr.bf16.mxu0 0
      %682 = vmatmul.mubr.bf16.gmra.mrb[0].mxu0 %v578
      %v683 = vpop.f32.mrb[0].mxu0
      %v684 = vadd.f32 %v543, %v683
      %v685 = vpop.f32.mrb[0].mxu0
      %v686 = vpop.f32.mrb[0].mxu0
      %v687 = vadd.f32 %v543, %v686
      %v688 = vpop.f32.mrb[0].mxu0
      %689 = vmatprep.mubr.bf16.mxu0 0
      %690 = vmatmul.mubr.bf16.gmra.mrb[0].mxu0 %v579
      %v691 = vpop.f32.mrb[0].mxu0
      %v692 = vadd.f32 %v543, %v691
      %v693 = vpop.f32.mrb[0].mxu0
      %v694 = vpop.f32.mrb[0].mxu0
      %v695 = vadd.f32 %v543, %v694
      %v696 = vpop.f32.mrb[0].mxu0
      %697 = vmatprep.mubr.bf16.mxu0 0
      %698 = vmatmul.mubr.bf16.gmra.mrb[0].mxu0 %v580
      %v699 = vpop.f32.mrb[0].mxu0
      %v700 = vadd.f32 %v543, %v699
      %v701 = vpop.f32.mrb[0].mxu0
      %v702 = vpop.f32.mrb[0].mxu0
      %v703 = vadd.f32 %v543, %v702
      %v704 = vpop.f32.mrb[0].mxu0
      %705 = vmatprep.mubr.bf16.mxu0 0
      %706 = vmatmul.mubr.bf16.gmra.mrb[0].mxu0 %v581
      %v707 = vpop.f32.mrb[0].mxu0
      %v708 = vadd.f32 %v543, %v707
      %v709 = vpop.f32.mrb[0].mxu0
      %v710 = vpop.f32.mrb[0].mxu0
      %v711 = vadd.f32 %v543, %v710
      %v712 = vpop.f32.mrb[0].mxu0
      %713 = vmatprep.mubr.bf16.mxu0 0
      %714 = vmatmul.mubr.bf16.gmra.mrb[0].mxu0 %v582
      %v715 = vpop.f32.mrb[0].mxu0
      %v716 = vadd.f32 %v543, %v715
      %v717 = vpop.f32.mrb[0].mxu0
      %v718 = vpop.f32.mrb[0].mxu0
      %v719 = vadd.f32 %v543, %v718
      %v720 = vpop.f32.mrb[0].mxu0
      %721 = vmatprep.mubr.bf16.mxu0 0
      %722 = vmatmul.mubr.bf16.gmra.mrb[0].mxu0 %v583
      %v723 = vpop.f32.mrb[0].mxu0
      %v724 = vadd.f32 %v543, %v723
      %v725 = vpop.f32.mrb[0].mxu0
      %v726 = vpop.f32.mrb[0].mxu0
      %v727 = vadd.f32 %v543, %v726
      %v728 = vpop.f32.mrb[0].mxu0
      %729 = vmatprep.mubr.bf16.mxu0 0
      %730 = vmatmul.mubr.bf16.gmra.mrb[0].mxu0 %v584
      %v731 = vpop.f32.mrb[0].mxu0
      %v732 = vadd.f32 %v543, %v731
      %v733 = vpop.f32.mrb[0].mxu0
      %v734 = vpop.f32.mrb[0].mxu0
      %v735 = vadd.f32 %v543, %v734
      %v736 = vpop.f32.mrb[0].mxu0
      %737 = vdwg.mxu0
      %v738 = vmax.f32 %v676, 0.0
      %v739 = vmax.f32 %v679, 0.0
      %v740 = vmax.f32 %v684, 0.0
      %v741 = vmax.f32 %v687, 0.0
      %v742 = vmax.f32 %v692, 0.0
      %v743 = vmax.f32 %v695, 0.0
      %v744 = vmax.f32 %v700, 0.0
      %v745 = vmax.f32 %v703, 0.0
      %v746 = vmax.f32 %v708, 0.0
      %v747 = vmax.f32 %v711, 0.0
      %v748 = vmax.f32 %v716, 0.0
      %v749 = vmax.f32 %v719, 0.0
      %v750 = vmax.f32 %v724, 0.0
      %v751 = vmax.f32 %v727, 0.0
      %v752 = vmax.f32 %v732, 0.0
      %v753 = vmax.f32 %v735, 0.0
      %p754 = scmp.eq.s32.totalorder %s25, 0
      %v757 = vunpack.c.l.b16 %v518
      %v758 = vunpack.c.l.b16 %v519
      %v759 = vpack.c.b16 %v758, %v757
      %761 = vmatprep.subr.bf16.mxu0 0
      %762 = vmatpush1.bf16.msra.mxu0 %v625
      %763 = vmatprep.subr.bf16.mxu0 0
      %764 = vmatpush1.bf16.msra.mxu0 %v626
      %765 = vmatprep.subr.bf16.mxu0 0
      %766 = vmatpush1.bf16.msra.mxu0 %v627
      %767 = vmatprep.subr.bf16.mxu0 0
      %768 = vmatpush1.bf16.msra.mxu0 %v628
      %769 = vmatprep.subr.bf16.mxu0 0
      %770 = vmatpush1.bf16.msra.mxu0 %v629
      %771 = vmatprep.subr.bf16.mxu0 0
      %772 = vmatpush1.bf16.msra.mxu0 %v630
      %773 = vmatprep.subr.bf16.mxu0 0
      %774 = vmatpush1.bf16.msra.mxu0 %v631
      %775 = vmatprep.subr.bf16.mxu0 0
      %776 = vmatpush1.bf16.msra.mxu0 %v632
      %777 = vmatprep.subr.bf16.mxu0 0
      %778 = vmatpush1.bf16.msra.mxu0 0
      %779 = vmatprep.subr.bf16.mxu0 0
      %780 = vmatpush1.bf16.msra.mxu0 0
      %781 = vmatprep.subr.bf16.mxu0 0
      %782 = vmatpush1.bf16.msra.mxu0 0
      %783 = vmatprep.subr.bf16.mxu0 0
      %784 = vmatpush1.bf16.msra.mxu0 0
      %785 = vmatprep.subr.bf16.mxu0 0
      %786 = vmatpush1.bf16.msra.mxu0 0
      %787 = vmatprep.subr.bf16.mxu0 0
      %788 = vmatpush1.bf16.msra.mxu0 0
      %789 = vmatprep.subr.bf16.mxu0 0
      %790 = vmatpush1.bf16.msra.mxu0 0
      %791 = vmatprep.subr.bf16.mxu0 0
      %792 = vmatpush1.bf16.msra.mxu0 0
      %793 = vmatprep.mubr.bf16.mxu0 0
      %794 = vmatmul.mubr.bf16.gmra.mrb[0].mxu0 %v759
      %v795 = vpop.f32.mrb[0].mxu0
      %v796 = vadd.f32 %v543, %v795
      %v797 = vpop.f32.mrb[0].mxu0
      %v798 = vpop.f32.mrb[0].mxu0
      %v799 = vadd.f32 %v543, %v798
      %v800 = vpop.f32.mrb[0].mxu0
      %801 = vdwg.mxu0
      %v802 = vmax.f32 %v796, 0.0
      %v803 = vmax.f32 %v799, 0.0
      %s804 = scalar_select %p754, 1, 0
      %v805 = vstv %s804
      %vm806 = vcmp.eq.s32.totalorder %v805, 1
      %v807 = vsel %vm806, 0.0, %v802
      %v808 = vsel %vm806, 0.0, %v803
      %p809 = scmp.eq.s32.totalorder %s25, 1
      %v812 = vunpack.c.l.b16 %v520
      %v813 = vunpack.c.l.b16 %v521
      %v814 = vpack.c.b16 %v813, %v812
      %816 = vmatprep.subr.bf16.mxu0 0
      %817 = vmatpush1.bf16.msra.mxu0 %v625
      %818 = vmatprep.subr.bf16.mxu0 0
      %819 = vmatpush1.bf16.msra.mxu0 %v626
      %820 = vmatprep.subr.bf16.mxu0 0
      %821 = vmatpush1.bf16.msra.mxu0 %v627
      %822 = vmatprep.subr.bf16.mxu0 0
      %823 = vmatpush1.bf16.msra.mxu0 %v628
      %824 = vmatprep.subr.bf16.mxu0 0
      %825 = vmatpush1.bf16.msra.mxu0 %v629
      %826 = vmatprep.subr.bf16.mxu0 0
      %827 = vmatpush1.bf16.msra.mxu0 %v630
      %828 = vmatprep.subr.bf16.mxu0 0
      %829 = vmatpush1.bf16.msra.mxu0 %v631
      %830 = vmatprep.subr.bf16.mxu0 0
      %831 = vmatpush1.bf16.msra.mxu0 %v632
      %832 = vmatprep.subr.bf16.mxu0 0
      %833 = vmatpush1.bf16.msra.mxu0 0
      %834 = vmatprep.subr.bf16.mxu0 0
      %835 = vmatpush1.bf16.msra.mxu0 0
      %836 = vmatprep.subr.bf16.mxu0 0
      %837 = vmatpush1.bf16.msra.mxu0 0
      %838 = vmatprep.subr.bf16.mxu0 0
      %839 = vmatpush1.bf16.msra.mxu0 0
      %840 = vmatprep.subr.bf16.mxu0 0
      %841 = vmatpush1.bf16.msra.mxu0 0
      %842 = vmatprep.subr.bf16.mxu0 0
      %843 = vmatpush1.bf16.msra.mxu0 0
      %844 = vmatprep.subr.bf16.mxu0 0
      %845 = vmatpush1.bf16.msra.mxu0 0
      %846 = vmatprep.subr.bf16.mxu0 0
      %847 = vmatpush1.bf16.msra.mxu0 0
      %848 = vmatprep.mubr.bf16.mxu0 0
      %849 = vmatmul.mubr.bf16.gmra.mrb[0].mxu0 %v814
      %v850 = vpop.f32.mrb[0].mxu0
      %v851 = vadd.f32 %v543, %v850
      %v852 = vpop.f32.mrb[0].mxu0
      %v853 = vpop.f32.mrb[0].mxu0
      %v854 = vadd.f32 %v543, %v853
      %v855 = vpop.f32.mrb[0].mxu0
      %856 = vdwg.mxu0
      %v857 = vmax.f32 %v851, 0.0
      %v858 = vmax.f32 %v854, 0.0
      %s859 = scalar_select %p809, 1, 0
      %v860 = vstv %s859
      %vm861 = vcmp.eq.s32.totalorder %v860, 1
      %v862 = vsel %vm861, 0.0, %v857
      %v863 = vsel %vm861, 0.0, %v858
      %v864 = vpack.c.bf16 %v739, %v738
      %v865 = vpack.c.bf16 %v741, %v740
      %v866 = vpack.c.bf16 %v743, %v742
      %v867 = vpack.c.bf16 %v745, %v744
      %v868 = vpack.c.bf16 %v747, %v746
      %v869 = vpack.c.bf16 %v749, %v748
      %v870 = vpack.c.bf16 %v751, %v750
      %v871 = vpack.c.bf16 %v753, %v752
      %v872 = vld [vmem:[%s5] sm:$0xf]
      %v873 = vld [vmem:[%s5 + $0x4] sm:$0xf]
      %v874 = vld [vmem:[%s5 + $0x8] sm:$0xf]
      %v875 = vld [vmem:[%s5 + $0xc] sm:$0xf]
      %v876 = vld [vmem:[%s5 + $0x10] sm:$0xf]
      %v877 = vld [vmem:[%s5 + $0x14] sm:$0xf]
      %v878 = vld [vmem:[%s5 + $0x18] sm:$0xf]
      %v879 = vld [vmem:[%s5 + $0x1c] sm:$0xf]
      %v880 = vld [vmem:[%s5 + $0x20] sm:$0xf]
      %v881 = vld [vmem:[%s5 + $0x24] sm:$0xf]
      %v882 = vld [vmem:[%s5 + $0x28] sm:$0xf]
      %v883 = vld [vmem:[%s5 + $0x2c] sm:$0xf]
      %v884 = vld [vmem:[%s5 + $0x30] sm:$0xf]
      %v885 = vld [vmem:[%s5 + $0x34] sm:$0xf]
      %v886 = vld [vmem:[%s5 + $0x38] sm:$0xf]
      %v887 = vld [vmem:[%s5 + $0x3c] sm:$0xf]
      %v888 = vld [vmem:[%s6] sm:$0x1]
      %v890 = vlaneseq
      %v891 = vshrl.u32 %v890, 7
      %v892 = vsub.s32 0, %v891
      %v893 = vrot.slane %v888, %v892
      %v911 = vunpack.c.l.b16 %v872
      %v912 = vunpack.c.l.b16 %v873
      %v913 = vunpack.c.l.b16 %v874
      %v914 = vunpack.c.l.b16 %v875
      %v915 = vunpack.c.l.b16 %v876
      %v916 = vunpack.c.l.b16 %v877
      %v917 = vunpack.c.l.b16 %v878
      %v918 = vunpack.c.l.b16 %v879
      %v919 = vunpack.c.l.b16 %v880
      %v920 = vunpack.c.l.b16 %v881
      %v921 = vunpack.c.l.b16 %v882
      %v922 = vunpack.c.l.b16 %v883
      %v923 = vunpack.c.l.b16 %v884
      %v924 = vunpack.c.l.b16 %v885
      %v925 = vunpack.c.l.b16 %v886
      %v926 = vunpack.c.l.b16 %v887
      %v927 = vpack.c.b16 %v912, %v911
      %v928 = vpack.c.b16 %v914, %v913
      %v929 = vpack.c.b16 %v916, %v915
      %v930 = vpack.c.b16 %v918, %v917
      %v931 = vpack.c.b16 %v920, %v919
      %v932 = vpack.c.b16 %v922, %v921
      %v933 = vpack.c.b16 %v924, %v923
      %v934 = vpack.c.b16 %v926, %v925
      %943 = vmatprep.subr.bf16.mxu0 0
      %944 = vmatpush1.bf16.msra.mxu0 %v927
      %945 = vmatprep.subr.bf16.mxu0 0
      %946 = vmatpush1.bf16.msra.mxu0 %v928
      %947 = vmatprep.subr.bf16.mxu0 0
      %948 = vmatpush1.bf16.msra.mxu0 %v929
      %949 = vmatprep.subr.bf16.mxu0 0
      %950 = vmatpush1.bf16.msra.mxu0 %v930
      %951 = vmatprep.subr.bf16.mxu0 0
      %952 = vmatpush1.bf16.msra.mxu0 %v931
      %953 = vmatprep.subr.bf16.mxu0 0
      %954 = vmatpush1.bf16.msra.mxu0 %v932
      %955 = vmatprep.subr.bf16.mxu0 0
      %956 = vmatpush1.bf16.msra.mxu0 %v933
      %957 = vmatprep.subr.bf16.mxu0 0
      %958 = vmatpush1.bf16.msra.mxu0 %v934
      %959 = vmatprep.subr.bf16.mxu0 0
      %960 = vmatpush1.bf16.msra.mxu0 0
      %961 = vmatprep.subr.bf16.mxu0 0
      %962 = vmatpush1.bf16.msra.mxu0 0
      %963 = vmatprep.subr.bf16.mxu0 0
      %964 = vmatpush1.bf16.msra.mxu0 0
      %965 = vmatprep.subr.bf16.mxu0 0
      %966 = vmatpush1.bf16.msra.mxu0 0
      %967 = vmatprep.subr.bf16.mxu0 0
      %968 = vmatpush1.bf16.msra.mxu0 0
      %969 = vmatprep.subr.bf16.mxu0 0
      %970 = vmatpush1.bf16.msra.mxu0 0
      %971 = vmatprep.subr.bf16.mxu0 0
      %972 = vmatpush1.bf16.msra.mxu0 0
      %973 = vmatprep.subr.bf16.mxu0 0
      %974 = vmatpush1.bf16.msra.mxu0 0
      %975 = vmatprep.mubr.bf16.mxu0 0
      %976 = vmatmul.mubr.bf16.gmra.mrb[0].mxu0 %v864
      %v977 = vpop.f32.mrb[0].mxu0
      %v978 = vadd.f32 %v893, %v977
      %v979 = vpop.f32.mrb[0].mxu0
      %v980 = vpop.f32.mrb[0].mxu0
      %v981 = vadd.f32 %v893, %v980
      %v982 = vpop.f32.mrb[0].mxu0
      %983 = vmatprep.mubr.bf16.mxu0 0
      %984 = vmatmul.mubr.bf16.gmra.mrb[0].mxu0 %v865
      %v985 = vpop.f32.mrb[0].mxu0
      %v986 = vadd.f32 %v893, %v985
      %v987 = vpop.f32.mrb[0].mxu0
      %v988 = vpop.f32.mrb[0].mxu0
      %v989 = vadd.f32 %v893, %v988
      %v990 = vpop.f32.mrb[0].mxu0
      %991 = vmatprep.mubr.bf16.mxu0 0
      %992 = vmatmul.mubr.bf16.gmra.mrb[0].mxu0 %v866
      %v993 = vpop.f32.mrb[0].mxu0
      %v994 = vadd.f32 %v893, %v993
      %v995 = vpop.f32.mrb[0].mxu0
      %v996 = vpop.f32.mrb[0].mxu0
      %v997 = vadd.f32 %v893, %v996
      %v998 = vpop.f32.mrb[0].mxu0
      %999 = vmatprep.mubr.bf16.mxu0 0
      %1000 = vmatmul.mubr.bf16.gmra.mrb[0].mxu0 %v867
      %v1001 = vpop.f32.mrb[0].mxu0
      %v1002 = vadd.f32 %v893, %v1001
      %v1003 = vpop.f32.mrb[0].mxu0
      %v1004 = vpop.f32.mrb[0].mxu0
      %v1005 = vadd.f32 %v893, %v1004
      %v1006 = vpop.f32.mrb[0].mxu0
      %1007 = vmatprep.mubr.bf16.mxu0 0
      %1008 = vmatmul.mubr.bf16.gmra.mrb[0].mxu0 %v868
      %v1009 = vpop.f32.mrb[0].mxu0
      %v1010 = vadd.f32 %v893, %v1009
      %v1011 = vpop.f32.mrb[0].mxu0
      %v1012 = vpop.f32.mrb[0].mxu0
      %v1013 = vadd.f32 %v893, %v1012
      %v1014 = vpop.f32.mrb[0].mxu0
      %1015 = vmatprep.mubr.bf16.mxu0 0
      %1016 = vmatmul.mubr.bf16.gmra.mrb[0].mxu0 %v869
      %v1017 = vpop.f32.mrb[0].mxu0
      %v1018 = vadd.f32 %v893, %v1017
      %v1019 = vpop.f32.mrb[0].mxu0
      %v1020 = vpop.f32.mrb[0].mxu0
      %v1021 = vadd.f32 %v893, %v1020
      %v1022 = vpop.f32.mrb[0].mxu0
      %1023 = vmatprep.mubr.bf16.mxu0 0
      %1024 = vmatmul.mubr.bf16.gmra.mrb[0].mxu0 %v870
      %v1025 = vpop.f32.mrb[0].mxu0
      %v1026 = vadd.f32 %v893, %v1025
      %v1027 = vpop.f32.mrb[0].mxu0
      %v1028 = vpop.f32.mrb[0].mxu0
      %v1029 = vadd.f32 %v893, %v1028
      %v1030 = vpop.f32.mrb[0].mxu0
      %1031 = vmatprep.mubr.bf16.mxu0 0
      %1032 = vmatmul.mubr.bf16.gmra.mrb[0].mxu0 %v871
      %v1033 = vpop.f32.mrb[0].mxu0
      %v1034 = vadd.f32 %v893, %v1033
      %v1035 = vpop.f32.mrb[0].mxu0
      %v1036 = vpop.f32.mrb[0].mxu0
      %v1037 = vadd.f32 %v893, %v1036
      %v1038 = vpop.f32.mrb[0].mxu0
      %1039 = vdwg.mxu0
      %v1040 = vmax.f32 %v978, 0.0
      %v1041 = vmax.f32 %v981, 0.0
      %v1042 = vmax.f32 %v986, 0.0
      %v1043 = vmax.f32 %v989, 0.0
      %v1044 = vmax.f32 %v994, 0.0
      %v1045 = vmax.f32 %v997, 0.0
      %v1046 = vmax.f32 %v1002, 0.0
      %v1047 = vmax.f32 %v1005, 0.0
      %v1048 = vmax.f32 %v1010, 0.0
      %v1049 = vmax.f32 %v1013, 0.0
      %v1050 = vmax.f32 %v1018, 0.0
      %v1051 = vmax.f32 %v1021, 0.0
      %v1052 = vmax.f32 %v1026, 0.0
      %v1053 = vmax.f32 %v1029, 0.0
      %v1054 = vmax.f32 %v1034, 0.0
      %v1055 = vmax.f32 %v1037, 0.0
      %v1056 = vlaneseq
      %v1057 = vshrl.u32 %v1056, 7
      %v1058 = vadd.s32 %v1057, 8
      %v1059 = vadd.s32 %v1057, 16
      %v1060 = vadd.s32 %v1057, 24
      %v1061 = vadd.s32 %v1057, 32
      %v1062 = vadd.s32 %v1057, 40
      %v1063 = vadd.s32 %v1057, 48
      %v1064 = vadd.s32 %v1057, 56
      %v1065 = vadd.s32 %v1057, 64
      %v1066 = vadd.s32 %v1057, 72
      %v1067 = vadd.s32 %v1057, 80
      %v1068 = vadd.s32 %v1057, 88
      %v1069 = vadd.s32 %v1057, 96
      %v1070 = vadd.s32 %v1057, 104
      %v1071 = vadd.s32 %v1057, 112
      %v1072 = vadd.s32 %v1057, 120
      %vm1073 = vcmp.lt.s32.totalorder %v1057, 0
      %v1074 = vsub.s32 0, %v1057
      %v1075 = vsel %vm1073, %v1074, %v1057
      %v1076 = vshrl.u32 %v1075, 4
      %v1077 = vand.u32 %v1075, 15
      %v1078 = vsub.s32 0, %v1077
      %v1079 = vsel %vm1073, %v1078, %v1077
      %vm1080 = vcmp.lt.s32.totalorder %v1058, 0
      %v1081 = vsub.s32 0, %v1058
      %v1082 = vsel %vm1080, %v1081, %v1058
      %v1083 = vshrl.u32 %v1082, 4
      %v1084 = vand.u32 %v1082, 15
      %v1085 = vsub.s32 0, %v1084
      %v1086 = vsel %vm1080, %v1085, %v1084
      %vm1087 = vcmp.lt.s32.totalorder %v1059, 0
      %v1088 = vsub.s32 0, %v1059
      %v1089 = vsel %vm1087, %v1088, %v1059
      %v1090 = vshrl.u32 %v1089, 4
      %v1091 = vand.u32 %v1089, 15
      %v1092 = vsub.s32 0, %v1091
      %v1093 = vsel %vm1087, %v1092, %v1091
      %vm1094 = vcmp.lt.s32.totalorder %v1060, 0
      %v1095 = vsub.s32 0, %v1060
      %v1096 = vsel %vm1094, %v1095, %v1060
      %v1097 = vshrl.u32 %v1096, 4
      %v1098 = vand.u32 %v1096, 15
      %v1099 = vsub.s32 0, %v1098
      %v1100 = vsel %vm1094, %v1099, %v1098
      %vm1101 = vcmp.lt.s32.totalorder %v1061, 0
      %v1102 = vsub.s32 0, %v1061
      %v1103 = vsel %vm1101, %v1102, %v1061
      %v1104 = vshrl.u32 %v1103, 4
      %v1105 = vand.u32 %v1103, 15
      %v1106 = vsub.s32 0, %v1105
      %v1107 = vsel %vm1101, %v1106, %v1105
      %vm1108 = vcmp.lt.s32.totalorder %v1062, 0
      %v1109 = vsub.s32 0, %v1062
      %v1110 = vsel %vm1108, %v1109, %v1062
      %v1111 = vshrl.u32 %v1110, 4
      %v1112 = vand.u32 %v1110, 15
      %v1113 = vsub.s32 0, %v1112
      %v1114 = vsel %vm1108, %v1113, %v1112
      %vm1115 = vcmp.lt.s32.totalorder %v1063, 0
      %v1116 = vsub.s32 0, %v1063
      %v1117 = vsel %vm1115, %v1116, %v1063
      %v1118 = vshrl.u32 %v1117, 4
      %v1119 = vand.u32 %v1117, 15
      %v1120 = vsub.s32 0, %v1119
      %v1121 = vsel %vm1115, %v1120, %v1119
      %vm1122 = vcmp.lt.s32.totalorder %v1064, 0
      %v1123 = vsub.s32 0, %v1064
      %v1124 = vsel %vm1122, %v1123, %v1064
      %v1125 = vshrl.u32 %v1124, 4
      %v1126 = vand.u32 %v1124, 15
      %v1127 = vsub.s32 0, %v1126
      %v1128 = vsel %vm1122, %v1127, %v1126
      %vm1129 = vcmp.lt.s32.totalorder %v1065, 0
      %v1130 = vsub.s32 0, %v1065
      %v1131 = vsel %vm1129, %v1130, %v1065
      %v1132 = vshrl.u32 %v1131, 4
      %v1133 = vand.u32 %v1131, 15
      %v1134 = vsub.s32 0, %v1133
      %v1135 = vsel %vm1129, %v1134, %v1133
      %vm1136 = vcmp.lt.s32.totalorder %v1066, 0
      %v1137 = vsub.s32 0, %v1066
      %v1138 = vsel %vm1136, %v1137, %v1066
      %v1139 = vshrl.u32 %v1138, 4
      %v1140 = vand.u32 %v1138, 15
      %v1141 = vsub.s32 0, %v1140
      %v1142 = vsel %vm1136, %v1141, %v1140
      %vm1143 = vcmp.lt.s32.totalorder %v1067, 0
      %v1144 = vsub.s32 0, %v1067
      %v1145 = vsel %vm1143, %v1144, %v1067
      %v1146 = vshrl.u32 %v1145, 4
      %v1147 = vand.u32 %v1145, 15
      %v1148 = vsub.s32 0, %v1147
      %v1149 = vsel %vm1143, %v1148, %v1147
      %vm1150 = vcmp.lt.s32.totalorder %v1068, 0
      %v1151 = vsub.s32 0, %v1068
      %v1152 = vsel %vm1150, %v1151, %v1068
      %v1153 = vshrl.u32 %v1152, 4
      %v1154 = vand.u32 %v1152, 15
      %v1155 = vsub.s32 0, %v1154
      %v1156 = vsel %vm1150, %v1155, %v1154
      %vm1157 = vcmp.lt.s32.totalorder %v1069, 0
      %v1158 = vsub.s32 0, %v1069
      %v1159 = vsel %vm1157, %v1158, %v1069
      %v1160 = vshrl.u32 %v1159, 4
      %v1161 = vand.u32 %v1159, 15
      %v1162 = vsub.s32 0, %v1161
      %v1163 = vsel %vm1157, %v1162, %v1161
      %vm1164 = vcmp.lt.s32.totalorder %v1070, 0
      %v1165 = vsub.s32 0, %v1070
      %v1166 = vsel %vm1164, %v1165, %v1070
      %v1167 = vshrl.u32 %v1166, 4
      %v1168 = vand.u32 %v1166, 15
      %v1169 = vsub.s32 0, %v1168
      %v1170 = vsel %vm1164, %v1169, %v1168
      %vm1171 = vcmp.lt.s32.totalorder %v1071, 0
      %v1172 = vsub.s32 0, %v1071
      %v1173 = vsel %vm1171, %v1172, %v1071
      %v1174 = vshrl.u32 %v1173, 4
      %v1175 = vand.u32 %v1173, 15
      %v1176 = vsub.s32 0, %v1175
      %v1177 = vsel %vm1171, %v1176, %v1175
      %vm1178 = vcmp.lt.s32.totalorder %v1072, 0
      %v1179 = vsub.s32 0, %v1072
      %v1180 = vsel %vm1178, %v1179, %v1072
      %v1181 = vshrl.u32 %v1180, 4
      %v1182 = vand.u32 %v1180, 15
      %v1183 = vsub.s32 0, %v1182
      %v1184 = vsel %vm1178, %v1183, %v1182
      %vm1185 = vcmp.ne.s32.totalorder %v1079, 0
      %vm1186 = vcmp.ne.s32.totalorder %v1086, 0
      %vm1187 = vcmp.ne.s32.totalorder %v1093, 0
      %vm1188 = vcmp.ne.s32.totalorder %v1100, 0
      %vm1189 = vcmp.ne.s32.totalorder %v1107, 0
      %vm1190 = vcmp.ne.s32.totalorder %v1114, 0
      %vm1191 = vcmp.ne.s32.totalorder %v1121, 0
      %vm1192 = vcmp.ne.s32.totalorder %v1128, 0
      %vm1193 = vcmp.ne.s32.totalorder %v1135, 0
      %vm1194 = vcmp.ne.s32.totalorder %v1142, 0
      %vm1195 = vcmp.ne.s32.totalorder %v1149, 0
      %vm1196 = vcmp.ne.s32.totalorder %v1156, 0
      %vm1197 = vcmp.ne.s32.totalorder %v1163, 0
      %vm1198 = vcmp.ne.s32.totalorder %v1170, 0
      %vm1199 = vcmp.ne.s32.totalorder %v1177, 0
      %vm1200 = vcmp.ne.s32.totalorder %v1184, 0
      %vm1201 = vcmp.lt.s32.totalorder %v1079, 0
      %vm1202 = vcmp.lt.s32.totalorder %v1086, 0
      %vm1203 = vcmp.lt.s32.totalorder %v1093, 0
      %vm1204 = vcmp.lt.s32.totalorder %v1100, 0
      %vm1205 = vcmp.lt.s32.totalorder %v1107, 0
      %vm1206 = vcmp.lt.s32.totalorder %v1114, 0
      %vm1207 = vcmp.lt.s32.totalorder %v1121, 0
      %vm1208 = vcmp.lt.s32.totalorder %v1128, 0
      %vm1209 = vcmp.lt.s32.totalorder %v1135, 0
      %vm1210 = vcmp.lt.s32.totalorder %v1142, 0
      %vm1211 = vcmp.lt.s32.totalorder %v1149, 0
      %vm1212 = vcmp.lt.s32.totalorder %v1156, 0
      %vm1213 = vcmp.lt.s32.totalorder %v1163, 0
      %vm1214 = vcmp.lt.s32.totalorder %v1170, 0
      %vm1215 = vcmp.lt.s32.totalorder %v1177, 0
      %vm1216 = vcmp.lt.s32.totalorder %v1184, 0
      %vm1217 = vmand %vm1201, %vm1185
      %vm1218 = vmand %vm1202, %vm1186
      %vm1219 = vmand %vm1203, %vm1187
      %vm1220 = vmand %vm1204, %vm1188
      %vm1221 = vmand %vm1205, %vm1189
      %vm1222 = vmand %vm1206, %vm1190
      %vm1223 = vmand %vm1207, %vm1191
      %vm1224 = vmand %vm1208, %vm1192
      %vm1225 = vmand %vm1209, %vm1193
      %vm1226 = vmand %vm1210, %vm1194
      %vm1227 = vmand %vm1211, %vm1195
      %vm1228 = vmand %vm1212, %vm1196
      %vm1229 = vmand %vm1213, %vm1197
      %vm1230 = vmand %vm1214, %vm1198
      %vm1231 = vmand %vm1215, %vm1199
      %vm1232 = vmand %vm1216, %vm1200
      %v1233 = vadd.s32 %v1079, 16
      %v1234 = vadd.s32 %v1086, 16
      %v1235 = vadd.s32 %v1093, 16
      %v1236 = vadd.s32 %v1100, 16
      %v1237 = vadd.s32 %v1107, 16
      %v1238 = vadd.s32 %v1114, 16
      %v1239 = vadd.s32 %v1121, 16
      %v1240 = vadd.s32 %v1128, 16
      %v1241 = vadd.s32 %v1135, 16
      %v1242 = vadd.s32 %v1142, 16
      %v1243 = vadd.s32 %v1149, 16
      %v1244 = vadd.s32 %v1156, 16
      %v1245 = vadd.s32 %v1163, 16
      %v1246 = vadd.s32 %v1170, 16
      %v1247 = vadd.s32 %v1177, 16
      %v1248 = vadd.s32 %v1184, 16
      %v1249 = vsel %vm1217, %v1233, %v1079
      %v1250 = vsel %vm1218, %v1234, %v1086
      %v1251 = vsel %vm1219, %v1235, %v1093
      %v1252 = vsel %vm1220, %v1236, %v1100
      %v1253 = vsel %vm1221, %v1237, %v1107
      %v1254 = vsel %vm1222, %v1238, %v1114
      %v1255 = vsel %vm1223, %v1239, %v1121
      %v1256 = vsel %vm1224, %v1240, %v1128
      %v1257 = vsel %vm1225, %v1241, %v1135
      %v1258 = vsel %vm1226, %v1242, %v1142
      %v1259 = vsel %vm1227, %v1243, %v1149
      %v1260 = vsel %vm1228, %v1244, %v1156
      %v1261 = vsel %vm1229, %v1245, %v1163
      %v1262 = vsel %vm1230, %v1246, %v1170
      %v1263 = vsel %vm1231, %v1247, %v1177
      %v1264 = vsel %vm1232, %v1248, %v1184
      %v1265 = vrot.slane %v807, 7
      %v1266 = vrot.slane %v808, 7
      %v1267 = vrot.slane %v738, 7
      %v1268 = vrot.slane %v739, 7
      %v1269 = vrot.slane %v740, 7
      %v1270 = vrot.slane %v741, 7
      %v1271 = vrot.slane %v742, 7
      %v1272 = vrot.slane %v743, 7
      %v1273 = vrot.slane %v744, 7
      %v1274 = vrot.slane %v745, 7
      %v1275 = vrot.slane %v746, 7
      %v1276 = vrot.slane %v747, 7
      %v1277 = vrot.slane %v748, 7
      %v1278 = vrot.slane %v749, 7
      %v1279 = vrot.slane %v750, 7
      %v1280 = vrot.slane %v751, 7
      %v1281 = vrot.slane %v863, 7
      %vm1282 = vcmp.lt.s32.totalorder %v1057, 1
      %v1283 = vsel %vm1282, %v1279, %v1280
      %v1284 = vsel %vm1282, %v1278, %v1279
      %v1285 = vsel %vm1282, %v1277, %v1278
      %v1286 = vsel %vm1282, %v1276, %v1277
      %v1287 = vsel %vm1282, %v1275, %v1276
      %v1288 = vsel %vm1282, %v1274, %v1275
      %v1289 = vsel %vm1282, %v1273, %v1274
      %v1290 = vsel %vm1282, %v1272, %v1273
      %v1291 = vsel %vm1282, %v1271, %v1272
      %v1292 = vsel %vm1282, %v1270, %v1271
      %v1293 = vsel %vm1282, %v1269, %v1270
      %v1294 = vsel %vm1282, %v1268, %v1269
      %v1295 = vsel %vm1282, %v1267, %v1268
      %v1296 = vsel %vm1282, %v1266, %v1267
      %v1297 = vsel %vm1282, %v1265, %v1266
      %v1298 = vsel %vm1282, %v1281, %v1265
      %vm1299 = vcmp.ge.s32.totalorder %v1249, 1
      %vm1300 = vcmp.ge.s32.totalorder %v1250, 1
      %vm1301 = vcmp.ge.s32.totalorder %v1251, 1
      %vm1302 = vcmp.ge.s32.totalorder %v1252, 1
      %vm1303 = vcmp.ge.s32.totalorder %v1253, 1
      %vm1304 = vcmp.ge.s32.totalorder %v1254, 1
      %vm1305 = vcmp.ge.s32.totalorder %v1255, 1
      %vm1306 = vcmp.ge.s32.totalorder %v1256, 1
      %vm1307 = vcmp.ge.s32.totalorder %v1257, 1
      %vm1308 = vcmp.ge.s32.totalorder %v1258, 1
      %vm1309 = vcmp.ge.s32.totalorder %v1259, 1
      %vm1310 = vcmp.ge.s32.totalorder %v1260, 1
      %vm1311 = vcmp.ge.s32.totalorder %v1261, 1
      %vm1312 = vcmp.ge.s32.totalorder %v1262, 1
      %vm1313 = vcmp.ge.s32.totalorder %v1263, 1
      %vm1314 = vcmp.ge.s32.totalorder %v1264, 1
      %v1315 = vsel %vm1299, %v1298, 0.0
      %v1316 = vsel %vm1300, %v1297, 0.0
      %v1317 = vsel %vm1301, %v1296, 0.0
      %v1318 = vsel %vm1302, %v1295, 0.0
      %v1319 = vsel %vm1303, %v1294, 0.0
      %v1320 = vsel %vm1304, %v1293, 0.0
      %v1321 = vsel %vm1305, %v1292, 0.0
      %v1322 = vsel %vm1306, %v1291, 0.0
      %v1323 = vsel %vm1307, %v1290, 0.0
      %v1324 = vsel %vm1308, %v1289, 0.0
      %v1325 = vsel %vm1309, %v1288, 0.0
      %v1326 = vsel %vm1310, %v1287, 0.0
      %v1327 = vsel %vm1311, %v1286, 0.0
      %v1328 = vsel %vm1312, %v1285, 0.0
      %v1329 = vsel %vm1313, %v1284, 0.0
      %v1330 = vsel %vm1314, %v1283, 0.0
      %v1331 = vpack.c.bf16 %v1316, %v1315
      %v1332 = vpack.c.bf16 %v1318, %v1317
      %v1333 = vpack.c.bf16 %v1320, %v1319
      %v1334 = vpack.c.bf16 %v1322, %v1321
      %v1335 = vpack.c.bf16 %v1324, %v1323
      %v1336 = vpack.c.bf16 %v1326, %v1325
      %v1337 = vpack.c.bf16 %v1328, %v1327
      %v1338 = vpack.c.bf16 %v1330, %v1329
      %v1339 = vpack.c.bf16 %v808, %v807
      %v1340 = vrot.slane %v807, 1
      %v1341 = vrot.slane %v808, 1
      %v1342 = vrot.slane %v738, 1
      %v1343 = vrot.slane %v739, 1
      %v1344 = vrot.slane %v740, 1
      %v1345 = vrot.slane %v741, 1
      %v1346 = vrot.slane %v742, 1
      %v1347 = vrot.slane %v743, 1
      %v1348 = vrot.slane %v744, 1
      %v1349 = vrot.slane %v745, 1
      %v1350 = vrot.slane %v746, 1
      %v1351 = vrot.slane %v747, 1
      %v1352 = vrot.slane %v748, 1
      %v1353 = vrot.slane %v749, 1
      %v1354 = vrot.slane %v750, 1
      %v1355 = vrot.slane %v751, 1
      %v1356 = vrot.slane %v752, 1
      %vm1357 = vcmp.lt.s32.totalorder %v1057, 7
      %v1358 = vsel %vm1357, %v1355, %v1356
      %v1359 = vsel %vm1357, %v1354, %v1355
      %v1360 = vsel %vm1357, %v1353, %v1354
      %v1361 = vsel %vm1357, %v1352, %v1353
      %v1362 = vsel %vm1357, %v1351, %v1352
      %v1363 = vsel %vm1357, %v1350, %v1351
      %v1364 = vsel %vm1357, %v1349, %v1350
      %v1365 = vsel %vm1357, %v1348, %v1349
      %v1366 = vsel %vm1357, %v1347, %v1348
      %v1367 = vsel %vm1357, %v1346, %v1347
      %v1368 = vsel %vm1357, %v1345, %v1346
      %v1369 = vsel %vm1357, %v1344, %v1345
      %v1370 = vsel %vm1357, %v1343, %v1344
      %v1371 = vsel %vm1357, %v1342, %v1343
      %v1372 = vsel %vm1357, %v1341, %v1342
      %v1373 = vsel %vm1357, %v1340, %v1341
      %vm1374 = vcmp.lt.s32.totalorder %v1249, 15
      %vm1375 = vcmp.lt.s32.totalorder %v1250, 15
      %vm1376 = vcmp.lt.s32.totalorder %v1251, 15
      %vm1377 = vcmp.lt.s32.totalorder %v1252, 15
      %vm1378 = vcmp.lt.s32.totalorder %v1253, 15
      %vm1379 = vcmp.lt.s32.totalorder %v1254, 15
      %vm1380 = vcmp.lt.s32.totalorder %v1255, 15
      %vm1381 = vcmp.lt.s32.totalorder %v1256, 15
      %vm1382 = vcmp.lt.s32.totalorder %v1257, 15
      %vm1383 = vcmp.lt.s32.totalorder %v1258, 15
      %vm1384 = vcmp.lt.s32.totalorder %v1259, 15
      %vm1385 = vcmp.lt.s32.totalorder %v1260, 15
      %vm1386 = vcmp.lt.s32.totalorder %v1261, 15
      %vm1387 = vcmp.lt.s32.totalorder %v1262, 15
      %vm1388 = vcmp.lt.s32.totalorder %v1263, 15
      %vm1389 = vcmp.lt.s32.totalorder %v1264, 15
      %v1390 = vsel %vm1374, %v1373, 0.0
      %v1391 = vsel %vm1375, %v1372, 0.0
      %v1392 = vsel %vm1376, %v1371, 0.0
      %v1393 = vsel %vm1377, %v1370, 0.0
      %v1394 = vsel %vm1378, %v1369, 0.0
      %v1395 = vsel %vm1379, %v1368, 0.0
      %v1396 = vsel %vm1380, %v1367, 0.0
      %v1397 = vsel %vm1381, %v1366, 0.0
      %v1398 = vsel %vm1382, %v1365, 0.0
      %v1399 = vsel %vm1383, %v1364, 0.0
      %v1400 = vsel %vm1384, %v1363, 0.0
      %v1401 = vsel %vm1385, %v1362, 0.0
      %v1402 = vsel %vm1386, %v1361, 0.0
      %v1403 = vsel %vm1387, %v1360, 0.0
      %v1404 = vsel %vm1388, %v1359, 0.0
      %v1405 = vsel %vm1389, %v1358, 0.0
      %v1406 = vpack.c.bf16 %v1391, %v1390
      %v1407 = vpack.c.bf16 %v1393, %v1392
      %v1408 = vpack.c.bf16 %v1395, %v1394
      %v1409 = vpack.c.bf16 %v1397, %v1396
      %v1410 = vpack.c.bf16 %v1399, %v1398
      %v1411 = vpack.c.bf16 %v1401, %v1400
      %v1412 = vpack.c.bf16 %v1403, %v1402
      %v1413 = vpack.c.bf16 %v1405, %v1404
      %v1414 = vrot.slane %v752, 7
      %v1415 = vrot.slane %v753, 7
      %v1416 = vsel %vm1282, %v1414, %v1415
      %v1417 = vsel %vm1282, %v1280, %v1414
      %v1418 = vsel %vm1299, %v1296, 0.0
      %v1419 = vsel %vm1300, %v1295, 0.0
      %v1420 = vsel %vm1301, %v1294, 0.0
      %v1421 = vsel %vm1302, %v1293, 0.0
      %v1422 = vsel %vm1303, %v1292, 0.0
      %v1423 = vsel %vm1304, %v1291, 0.0
      %v1424 = vsel %vm1305, %v1290, 0.0
      %v1425 = vsel %vm1306, %v1289, 0.0
      %v1426 = vsel %vm1307, %v1288, 0.0
      %v1427 = vsel %vm1308, %v1287, 0.0
      %v1428 = vsel %vm1309, %v1286, 0.0
      %v1429 = vsel %vm1310, %v1285, 0.0
      %v1430 = vsel %vm1311, %v1284, 0.0
      %v1431 = vsel %vm1312, %v1283, 0.0
      %v1432 = vsel %vm1313, %v1417, 0.0
      %v1433 = vsel %vm1314, %v1416, 0.0
      %v1434 = vpack.c.bf16 %v1419, %v1418
      %v1435 = vpack.c.bf16 %v1421, %v1420
      %v1436 = vpack.c.bf16 %v1423, %v1422
      %v1437 = vpack.c.bf16 %v1425, %v1424
      %v1438 = vpack.c.bf16 %v1427, %v1426
      %v1439 = vpack.c.bf16 %v1429, %v1428
      %v1440 = vpack.c.bf16 %v1431, %v1430
      %v1441 = vpack.c.bf16 %v1433, %v1432
      %v1442 = vrot.slane %v753, 1
      %v1443 = vrot.slane %v862, 1
      %v1444 = vsel %vm1357, %v1442, %v1443
      %v1445 = vsel %vm1357, %v1356, %v1442
      %v1446 = vsel %vm1374, %v1371, 0.0
      %v1447 = vsel %vm1375, %v1370, 0.0
      %v1448 = vsel %vm1376, %v1369, 0.0
      %v1449 = vsel %vm1377, %v1368, 0.0
      %v1450 = vsel %vm1378, %v1367, 0.0
      %v1451 = vsel %vm1379, %v1366, 0.0
      %v1452 = vsel %vm1380, %v1365, 0.0
      %v1453 = vsel %vm1381, %v1364, 0.0
      %v1454 = vsel %vm1382, %v1363, 0.0
      %v1455 = vsel %vm1383, %v1362, 0.0
      %v1456 = vsel %vm1384, %v1361, 0.0
      %v1457 = vsel %vm1385, %v1360, 0.0
      %v1458 = vsel %vm1386, %v1359, 0.0
      %v1459 = vsel %vm1387, %v1358, 0.0
      %v1460 = vsel %vm1388, %v1445, 0.0
      %v1461 = vsel %vm1389, %v1444, 0.0
      %v1462 = vpack.c.bf16 %v1447, %v1446
      %v1463 = vpack.c.bf16 %v1449, %v1448
      %v1464 = vpack.c.bf16 %v1451, %v1450
      %v1465 = vpack.c.bf16 %v1453, %v1452
      %v1466 = vpack.c.bf16 %v1455, %v1454
      %v1467 = vpack.c.bf16 %v1457, %v1456
      %v1468 = vpack.c.bf16 %v1459, %v1458
      %v1469 = vpack.c.bf16 %v1461, %v1460
      %v1470 = vrot.slane %v862, 7
      %v1471 = vsel %vm1282, %v1470, %v1281
      %v1472 = vsel %vm1282, %v1415, %v1470
      %v1473 = vsel %vm1299, %v1294, 0.0
      %v1474 = vsel %vm1300, %v1293, 0.0
      %v1475 = vsel %vm1301, %v1292, 0.0
      %v1476 = vsel %vm1302, %v1291, 0.0
      %v1477 = vsel %vm1303, %v1290, 0.0
      %v1478 = vsel %vm1304, %v1289, 0.0
      %v1479 = vsel %vm1305, %v1288, 0.0
      %v1480 = vsel %vm1306, %v1287, 0.0
      %v1481 = vsel %vm1307, %v1286, 0.0
      %v1482 = vsel %vm1308, %v1285, 0.0
      %v1483 = vsel %vm1309, %v1284, 0.0
      %v1484 = vsel %vm1310, %v1283, 0.0
      %v1485 = vsel %vm1311, %v1417, 0.0
      %v1486 = vsel %vm1312, %v1416, 0.0
      %v1487 = vsel %vm1313, %v1472, 0.0
      %v1488 = vsel %vm1314, %v1471, 0.0
      %v1489 = vpack.c.bf16 %v1474, %v1473
      %v1490 = vpack.c.bf16 %v1476, %v1475
      %v1491 = vpack.c.bf16 %v1478, %v1477
      %v1492 = vpack.c.bf16 %v1480, %v1479
      %v1493 = vpack.c.bf16 %v1482, %v1481
      %v1494 = vpack.c.bf16 %v1484, %v1483
      %v1495 = vpack.c.bf16 %v1486, %v1485
      %v1496 = vpack.c.bf16 %v1488, %v1487
      %v1497 = vpack.c.bf16 %v863, %v862
      %v1498 = vrot.slane %v863, 1
      %v1499 = vsel %vm1357, %v1443, %v1498
      %v1500 = vsel %vm1357, %v1498, %v1340
      %v1501 = vsel %vm1374, %v1369, 0.0
      %v1502 = vsel %vm1375, %v1368, 0.0
      %v1503 = vsel %vm1376, %v1367, 0.0
      %v1504 = vsel %vm1377, %v1366, 0.0
      %v1505 = vsel %vm1378, %v1365, 0.0
      %v1506 = vsel %vm1379, %v1364, 0.0
      %v1507 = vsel %vm1380, %v1363, 0.0
      %v1508 = vsel %vm1381, %v1362, 0.0
      %v1509 = vsel %vm1382, %v1361, 0.0
      %v1510 = vsel %vm1383, %v1360, 0.0
      %v1511 = vsel %vm1384, %v1359, 0.0
      %v1512 = vsel %vm1385, %v1358, 0.0
      %v1513 = vsel %vm1386, %v1445, 0.0
      %v1514 = vsel %vm1387, %v1444, 0.0
      %v1515 = vsel %vm1388, %v1499, 0.0
      %v1516 = vsel %vm1389, %v1500, 0.0
      %v1517 = vpack.c.bf16 %v1502, %v1501
      %v1518 = vpack.c.bf16 %v1504, %v1503
      %v1519 = vpack.c.bf16 %v1506, %v1505
      %v1520 = vpack.c.bf16 %v1508, %v1507
      %v1521 = vpack.c.bf16 %v1510, %v1509
      %v1522 = vpack.c.bf16 %v1512, %v1511
      %v1523 = vpack.c.bf16 %v1514, %v1513
      %v1524 = vpack.c.bf16 %v1516, %v1515
      %v1525 = vld [vmem:[%s7] sm:$0xf]
      %v1526 = vld [vmem:[%s7 + $0x4] sm:$0xf]
      %v1527 = vld [vmem:[%s7 + $0x8] sm:$0xf]
      %v1528 = vld [vmem:[%s7 + $0xc] sm:$0xf]
      %v1529 = vld [vmem:[%s7 + $0x10] sm:$0xf]
      %v1530 = vld [vmem:[%s7 + $0x14] sm:$0xf]
      %v1531 = vld [vmem:[%s7 + $0x18] sm:$0xf]
      %v1532 = vld [vmem:[%s7 + $0x1c] sm:$0xf]
      %v1533 = vld [vmem:[%s7 + $0x20] sm:$0xf]
      %v1534 = vld [vmem:[%s7 + $0x24] sm:$0xf]
      %v1535 = vld [vmem:[%s7 + $0x28] sm:$0xf]
      %v1536 = vld [vmem:[%s7 + $0x2c] sm:$0xf]
      %v1537 = vld [vmem:[%s7 + $0x30] sm:$0xf]
      %v1538 = vld [vmem:[%s7 + $0x34] sm:$0xf]
      %v1539 = vld [vmem:[%s7 + $0x38] sm:$0xf]
      %v1540 = vld [vmem:[%s7 + $0x3c] sm:$0xf]
      %v1541 = vld [vmem:[%s7 + $0x40] sm:$0xf]
      %v1542 = vld [vmem:[%s7 + $0x44] sm:$0xf]
      %v1543 = vld [vmem:[%s7 + $0x48] sm:$0xf]
      %v1544 = vld [vmem:[%s7 + $0x4c] sm:$0xf]
      %v1545 = vld [vmem:[%s7 + $0x50] sm:$0xf]
      %v1546 = vld [vmem:[%s7 + $0x54] sm:$0xf]
      %v1547 = vld [vmem:[%s7 + $0x58] sm:$0xf]
      %v1548 = vld [vmem:[%s7 + $0x5c] sm:$0xf]
      %v1549 = vld [vmem:[%s7 + $0x60] sm:$0xf]
      %v1550 = vld [vmem:[%s7 + $0x64] sm:$0xf]
      %v1551 = vld [vmem:[%s7 + $0x68] sm:$0xf]
      %v1552 = vld [vmem:[%s7 + $0x6c] sm:$0xf]
      %v1553 = vld [vmem:[%s7 + $0x70] sm:$0xf]
      %v1554 = vld [vmem:[%s7 + $0x74] sm:$0xf]
      %v1555 = vld [vmem:[%s7 + $0x78] sm:$0xf]
      %v1556 = vld [vmem:[%s7 + $0x7c] sm:$0xf]
      %v1557 = vld [vmem:[%s7 + $0x80] sm:$0xf]
      %v1558 = vld [vmem:[%s7 + $0x84] sm:$0xf]
      %v1559 = vld [vmem:[%s7 + $0x88] sm:$0xf]
      %v1560 = vld [vmem:[%s7 + $0x8c] sm:$0xf]
      %v1561 = vld [vmem:[%s7 + $0x90] sm:$0xf]
      %v1562 = vld [vmem:[%s7 + $0x94] sm:$0xf]
      %v1563 = vld [vmem:[%s7 + $0x98] sm:$0xf]
      %v1564 = vld [vmem:[%s7 + $0x9c] sm:$0xf]
      %v1565 = vld [vmem:[%s7 + $0xa0] sm:$0xf]
      %v1566 = vld [vmem:[%s7 + $0xa4] sm:$0xf]
      %v1567 = vld [vmem:[%s7 + $0xa8] sm:$0xf]
      %v1568 = vld [vmem:[%s7 + $0xac] sm:$0xf]
      %v1569 = vld [vmem:[%s7 + $0xb0] sm:$0xf]
      %v1570 = vld [vmem:[%s7 + $0xb4] sm:$0xf]
      %v1571 = vld [vmem:[%s7 + $0xb8] sm:$0xf]
      %v1572 = vld [vmem:[%s7 + $0xbc] sm:$0xf]
      %v1573 = vld [vmem:[%s7 + $0xc0] sm:$0xf]
      %v1574 = vld [vmem:[%s7 + $0xc4] sm:$0xf]
      %v1575 = vld [vmem:[%s7 + $0xc8] sm:$0xf]
      %v1576 = vld [vmem:[%s7 + $0xcc] sm:$0xf]
      %v1577 = vld [vmem:[%s7 + $0xd0] sm:$0xf]
      %v1578 = vld [vmem:[%s7 + $0xd4] sm:$0xf]
      %v1579 = vld [vmem:[%s7 + $0xd8] sm:$0xf]
      %v1580 = vld [vmem:[%s7 + $0xdc] sm:$0xf]
      %v1581 = vld [vmem:[%s7 + $0xe0] sm:$0xf]
      %v1582 = vld [vmem:[%s7 + $0xe4] sm:$0xf]
      %v1583 = vld [vmem:[%s7 + $0xe8] sm:$0xf]
      %v1584 = vld [vmem:[%s7 + $0xec] sm:$0xf]
      %v1585 = vld [vmem:[%s7 + $0xf0] sm:$0xf]
      %v1586 = vld [vmem:[%s7 + $0xf4] sm:$0xf]
      %v1587 = vld [vmem:[%s7 + $0xf8] sm:$0xf]
      %v1588 = vld [vmem:[%s7 + $0xfc] sm:$0xf]
      %v1589 = vld [vmem:[%s7 + $0x100] sm:$0xf]
      %v1590 = vld [vmem:[%s7 + $0x104] sm:$0xf]
      %v1591 = vld [vmem:[%s7 + $0x108] sm:$0xf]
      %v1592 = vld [vmem:[%s7 + $0x10c] sm:$0xf]
      %v1593 = vld [vmem:[%s7 + $0x110] sm:$0xf]
      %v1594 = vld [vmem:[%s7 + $0x114] sm:$0xf]
      %v1595 = vld [vmem:[%s7 + $0x118] sm:$0xf]
      %v1596 = vld [vmem:[%s7 + $0x11c] sm:$0xf]
      %v1597 = vld [vmem:[%s7 + $0x120] sm:$0xf]
      %v1598 = vld [vmem:[%s7 + $0x124] sm:$0xf]
      %v1599 = vld [vmem:[%s7 + $0x128] sm:$0xf]
      %v1600 = vld [vmem:[%s7 + $0x12c] sm:$0xf]
      %v1601 = vld [vmem:[%s7 + $0x130] sm:$0xf]
      %v1602 = vld [vmem:[%s7 + $0x134] sm:$0xf]
      %v1603 = vld [vmem:[%s7 + $0x138] sm:$0xf]
      %v1604 = vld [vmem:[%s7 + $0x13c] sm:$0xf]
      %v1605 = vld [vmem:[%s7 + $0x140] sm:$0xf]
      %v1606 = vld [vmem:[%s7 + $0x144] sm:$0xf]
      %v1607 = vld [vmem:[%s7 + $0x148] sm:$0xf]
      %v1608 = vld [vmem:[%s7 + $0x14c] sm:$0xf]
      %v1609 = vld [vmem:[%s7 + $0x150] sm:$0xf]
      %v1610 = vld [vmem:[%s7 + $0x154] sm:$0xf]
      %v1611 = vld [vmem:[%s7 + $0x158] sm:$0xf]
      %v1612 = vld [vmem:[%s7 + $0x15c] sm:$0xf]
      %v1613 = vld [vmem:[%s7 + $0x160] sm:$0xf]
      %v1614 = vld [vmem:[%s7 + $0x164] sm:$0xf]
      %v1615 = vld [vmem:[%s7 + $0x168] sm:$0xf]
      %v1616 = vld [vmem:[%s7 + $0x16c] sm:$0xf]
      %v1617 = vld [vmem:[%s7 + $0x170] sm:$0xf]
      %v1618 = vld [vmem:[%s7 + $0x174] sm:$0xf]
      %v1619 = vld [vmem:[%s7 + $0x178] sm:$0xf]
      %v1620 = vld [vmem:[%s7 + $0x17c] sm:$0xf]
      %v1621 = vld [vmem:[%s7 + $0x180] sm:$0xf]
      %v1622 = vld [vmem:[%s7 + $0x184] sm:$0xf]
      %v1623 = vld [vmem:[%s7 + $0x188] sm:$0xf]
      %v1624 = vld [vmem:[%s7 + $0x18c] sm:$0xf]
      %v1625 = vld [vmem:[%s7 + $0x190] sm:$0xf]
      %v1626 = vld [vmem:[%s7 + $0x194] sm:$0xf]
      %v1627 = vld [vmem:[%s7 + $0x198] sm:$0xf]
      %v1628 = vld [vmem:[%s7 + $0x19c] sm:$0xf]
      %v1629 = vld [vmem:[%s7 + $0x1a0] sm:$0xf]
      %v1630 = vld [vmem:[%s7 + $0x1a4] sm:$0xf]
      %v1631 = vld [vmem:[%s7 + $0x1a8] sm:$0xf]
      %v1632 = vld [vmem:[%s7 + $0x1ac] sm:$0xf]
      %v1633 = vld [vmem:[%s7 + $0x1b0] sm:$0xf]
      %v1634 = vld [vmem:[%s7 + $0x1b4] sm:$0xf]
      %v1635 = vld [vmem:[%s7 + $0x1b8] sm:$0xf]
      %v1636 = vld [vmem:[%s7 + $0x1bc] sm:$0xf]
      %v1637 = vld [vmem:[%s7 + $0x1c0] sm:$0xf]
      %v1638 = vld [vmem:[%s7 + $0x1c4] sm:$0xf]
      %v1639 = vld [vmem:[%s7 + $0x1c8] sm:$0xf]
      %v1640 = vld [vmem:[%s7 + $0x1cc] sm:$0xf]
      %v1641 = vld [vmem:[%s7 + $0x1d0] sm:$0xf]
      %v1642 = vld [vmem:[%s7 + $0x1d4] sm:$0xf]
      %v1643 = vld [vmem:[%s7 + $0x1d8] sm:$0xf]
      %v1644 = vld [vmem:[%s7 + $0x1dc] sm:$0xf]
      %v1645 = vld [vmem:[%s7 + $0x1e0] sm:$0xf]
      %v1646 = vld [vmem:[%s7 + $0x1e4] sm:$0xf]
      %v1647 = vld [vmem:[%s7 + $0x1e8] sm:$0xf]
      %v1648 = vld [vmem:[%s7 + $0x1ec] sm:$0xf]
      %v1649 = vld [vmem:[%s7 + $0x1f0] sm:$0xf]
      %v1650 = vld [vmem:[%s7 + $0x1f4] sm:$0xf]
      %v1651 = vld [vmem:[%s7 + $0x1f8] sm:$0xf]
      %v1652 = vld [vmem:[%s7 + $0x1fc] sm:$0xf]
      %v1653 = vld [vmem:[%s7 + $0x200] sm:$0xf]
      %v1654 = vld [vmem:[%s7 + $0x204] sm:$0xf]
      %v1655 = vld [vmem:[%s7 + $0x208] sm:$0xf]
      %v1656 = vld [vmem:[%s7 + $0x20c] sm:$0xf]
      %v1657 = vld [vmem:[%s7 + $0x210] sm:$0xf]
      %v1658 = vld [vmem:[%s7 + $0x214] sm:$0xf]
      %v1659 = vld [vmem:[%s7 + $0x218] sm:$0xf]
      %v1660 = vld [vmem:[%s7 + $0x21c] sm:$0xf]
      %v1661 = vld [vmem:[%s7 + $0x220] sm:$0xf]
      %v1662 = vld [vmem:[%s7 + $0x224] sm:$0xf]
      %v1663 = vld [vmem:[%s7 + $0x228] sm:$0xf]
      %v1664 = vld [vmem:[%s7 + $0x22c] sm:$0xf]
      %v1665 = vld [vmem:[%s7 + $0x230] sm:$0xf]
      %v1666 = vld [vmem:[%s7 + $0x234] sm:$0xf]
      %v1667 = vld [vmem:[%s7 + $0x238] sm:$0xf]
      %v1668 = vld [vmem:[%s7 + $0x23c] sm:$0xf]
      %v1669 = vld [vmem:[%s8] sm:$0x1]
      %v1671 = vlaneseq
      %v1672 = vshrl.u32 %v1671, 7
      %v1673 = vsub.s32 0, %v1672
      %v1674 = vrot.slane %v1669, %v1673
      %v1820 = vunpack.c.l.b16 %v1525
      %v1821 = vunpack.c.l.b16 %v1526
      %v1822 = vunpack.c.l.b16 %v1527
      %v1823 = vunpack.c.l.b16 %v1528
      %v1824 = vunpack.c.l.b16 %v1529
      %v1825 = vunpack.c.l.b16 %v1530
      %v1826 = vunpack.c.l.b16 %v1531
      %v1827 = vunpack.c.l.b16 %v1532
      %v1828 = vunpack.c.l.b16 %v1533
      %v1829 = vunpack.c.l.b16 %v1534
      %v1830 = vunpack.c.l.b16 %v1535
      %v1831 = vunpack.c.l.b16 %v1536
      %v1832 = vunpack.c.l.b16 %v1537
      %v1833 = vunpack.c.l.b16 %v1538
      %v1834 = vunpack.c.l.b16 %v1539
      %v1835 = vunpack.c.l.b16 %v1540
      %v1836 = vunpack.c.l.b16 %v1541
      %v1837 = vunpack.c.l.b16 %v1542
      %v1838 = vunpack.c.l.b16 %v1543
      %v1839 = vunpack.c.l.b16 %v1544
      %v1840 = vunpack.c.l.b16 %v1545
      %v1841 = vunpack.c.l.b16 %v1546
      %v1842 = vunpack.c.l.b16 %v1547
      %v1843 = vunpack.c.l.b16 %v1548
      %v1844 = vunpack.c.l.b16 %v1549
      %v1845 = vunpack.c.l.b16 %v1550
      %v1846 = vunpack.c.l.b16 %v1551
      %v1847 = vunpack.c.l.b16 %v1552
      %v1848 = vunpack.c.l.b16 %v1553
      %v1849 = vunpack.c.l.b16 %v1554
      %v1850 = vunpack.c.l.b16 %v1555
      %v1851 = vunpack.c.l.b16 %v1556
      %v1852 = vunpack.c.l.b16 %v1557
      %v1853 = vunpack.c.l.b16 %v1558
      %v1854 = vunpack.c.l.b16 %v1559
      %v1855 = vunpack.c.l.b16 %v1560
      %v1856 = vunpack.c.l.b16 %v1561
      %v1857 = vunpack.c.l.b16 %v1562
      %v1858 = vunpack.c.l.b16 %v1563
      %v1859 = vunpack.c.l.b16 %v1564
      %v1860 = vunpack.c.l.b16 %v1565
      %v1861 = vunpack.c.l.b16 %v1566
      %v1862 = vunpack.c.l.b16 %v1567
      %v1863 = vunpack.c.l.b16 %v1568
      %v1864 = vunpack.c.l.b16 %v1569
      %v1865 = vunpack.c.l.b16 %v1570
      %v1866 = vunpack.c.l.b16 %v1571
      %v1867 = vunpack.c.l.b16 %v1572
      %v1868 = vunpack.c.l.b16 %v1573
      %v1869 = vunpack.c.l.b16 %v1574
      %v1870 = vunpack.c.l.b16 %v1575
      %v1871 = vunpack.c.l.b16 %v1576
      %v1872 = vunpack.c.l.b16 %v1577
      %v1873 = vunpack.c.l.b16 %v1578
      %v1874 = vunpack.c.l.b16 %v1579
      %v1875 = vunpack.c.l.b16 %v1580
      %v1876 = vunpack.c.l.b16 %v1581
      %v1877 = vunpack.c.l.b16 %v1582
      %v1878 = vunpack.c.l.b16 %v1583
      %v1879 = vunpack.c.l.b16 %v1584
      %v1880 = vunpack.c.l.b16 %v1585
      %v1881 = vunpack.c.l.b16 %v1586
      %v1882 = vunpack.c.l.b16 %v1587
      %v1883 = vunpack.c.l.b16 %v1588
      %v1884 = vunpack.c.l.b16 %v1589
      %v1885 = vunpack.c.l.b16 %v1590
      %v1886 = vunpack.c.l.b16 %v1591
      %v1887 = vunpack.c.l.b16 %v1592
      %v1888 = vunpack.c.l.b16 %v1593
      %v1889 = vunpack.c.l.b16 %v1594
      %v1890 = vunpack.c.l.b16 %v1595
      %v1891 = vunpack.c.l.b16 %v1596
      %v1892 = vunpack.c.l.b16 %v1597
      %v1893 = vunpack.c.l.b16 %v1598
      %v1894 = vunpack.c.l.b16 %v1599
      %v1895 = vunpack.c.l.b16 %v1600
      %v1896 = vunpack.c.l.b16 %v1601
      %v1897 = vunpack.c.l.b16 %v1602
      %v1898 = vunpack.c.l.b16 %v1603
      %v1899 = vunpack.c.l.b16 %v1604
      %v1900 = vunpack.c.l.b16 %v1605
      %v1901 = vunpack.c.l.b16 %v1606
      %v1902 = vunpack.c.l.b16 %v1607
      %v1903 = vunpack.c.l.b16 %v1608
      %v1904 = vunpack.c.l.b16 %v1609
      %v1905 = vunpack.c.l.b16 %v1610
      %v1906 = vunpack.c.l.b16 %v1611
      %v1907 = vunpack.c.l.b16 %v1612
      %v1908 = vunpack.c.l.b16 %v1613
      %v1909 = vunpack.c.l.b16 %v1614
      %v1910 = vunpack.c.l.b16 %v1615
      %v1911 = vunpack.c.l.b16 %v1616
      %v1912 = vunpack.c.l.b16 %v1617
      %v1913 = vunpack.c.l.b16 %v1618
      %v1914 = vunpack.c.l.b16 %v1619
      %v1915 = vunpack.c.l.b16 %v1620
      %v1916 = vunpack.c.l.b16 %v1621
      %v1917 = vunpack.c.l.b16 %v1622
      %v1918 = vunpack.c.l.b16 %v1623
      %v1919 = vunpack.c.l.b16 %v1624
      %v1920 = vunpack.c.l.b16 %v1625
      %v1921 = vunpack.c.l.b16 %v1626
      %v1922 = vunpack.c.l.b16 %v1627
      %v1923 = vunpack.c.l.b16 %v1628
      %v1924 = vunpack.c.l.b16 %v1629
      %v1925 = vunpack.c.l.b16 %v1630
      %v1926 = vunpack.c.l.b16 %v1631
      %v1927 = vunpack.c.l.b16 %v1632
      %v1928 = vunpack.c.l.b16 %v1633
      %v1929 = vunpack.c.l.b16 %v1634
      %v1930 = vunpack.c.l.b16 %v1635
      %v1931 = vunpack.c.l.b16 %v1636
      %v1932 = vunpack.c.l.b16 %v1637
      %v1933 = vunpack.c.l.b16 %v1638
      %v1934 = vunpack.c.l.b16 %v1639
      %v1935 = vunpack.c.l.b16 %v1640
      %v1936 = vunpack.c.l.b16 %v1641
      %v1937 = vunpack.c.l.b16 %v1642
      %v1938 = vunpack.c.l.b16 %v1643
      %v1939 = vunpack.c.l.b16 %v1644
      %v1940 = vunpack.c.l.b16 %v1645
      %v1941 = vunpack.c.l.b16 %v1646
      %v1942 = vunpack.c.l.b16 %v1647
      %v1943 = vunpack.c.l.b16 %v1648
      %v1944 = vunpack.c.l.b16 %v1649
      %v1945 = vunpack.c.l.b16 %v1650
      %v1946 = vunpack.c.l.b16 %v1651
      %v1947 = vunpack.c.l.b16 %v1652
      %v1948 = vunpack.c.l.b16 %v1653
      %v1949 = vunpack.c.l.b16 %v1654
      %v1950 = vunpack.c.l.b16 %v1655
      %v1951 = vunpack.c.l.b16 %v1656
      %v1952 = vunpack.c.l.b16 %v1657
      %v1953 = vunpack.c.l.b16 %v1658
      %v1954 = vunpack.c.l.b16 %v1659
      %v1955 = vunpack.c.l.b16 %v1660
      %v1956 = vunpack.c.l.b16 %v1661
      %v1957 = vunpack.c.l.b16 %v1662
      %v1958 = vunpack.c.l.b16 %v1663
      %v1959 = vunpack.c.l.b16 %v1664
      %v1960 = vunpack.c.l.b16 %v1665
      %v1961 = vunpack.c.l.b16 %v1666
      %v1962 = vunpack.c.l.b16 %v1667
      %v1963 = vunpack.c.l.b16 %v1668
      %v1964 = vpack.c.b16 %v1821, %v1820
      %v1965 = vpack.c.b16 %v1823, %v1822
      %v1966 = vpack.c.b16 %v1825, %v1824
      %v1967 = vpack.c.b16 %v1827, %v1826
      %v1968 = vpack.c.b16 %v1829, %v1828
      %v1969 = vpack.c.b16 %v1831, %v1830
      %v1970 = vpack.c.b16 %v1833, %v1832
      %v1971 = vpack.c.b16 %v1835, %v1834
      %v1972 = vpack.c.b16 %v1837, %v1836
      %v1973 = vpack.c.b16 %v1839, %v1838
      %v1974 = vpack.c.b16 %v1841, %v1840
      %v1975 = vpack.c.b16 %v1843, %v1842
      %v1976 = vpack.c.b16 %v1845, %v1844
      %v1977 = vpack.c.b16 %v1847, %v1846
      %v1978 = vpack.c.b16 %v1849, %v1848
      %v1979 = vpack.c.b16 %v1851, %v1850
      %v1980 = vpack.c.b16 %v1853, %v1852
      %v1981 = vpack.c.b16 %v1855, %v1854
      %v1982 = vpack.c.b16 %v1857, %v1856
      %v1983 = vpack.c.b16 %v1859, %v1858
      %v1984 = vpack.c.b16 %v1861, %v1860
      %v1985 = vpack.c.b16 %v1863, %v1862
      %v1986 = vpack.c.b16 %v1865, %v1864
      %v1987 = vpack.c.b16 %v1867, %v1866
      %v1988 = vpack.c.b16 %v1869, %v1868
      %v1989 = vpack.c.b16 %v1871, %v1870
      %v1990 = vpack.c.b16 %v1873, %v1872
      %v1991 = vpack.c.b16 %v1875, %v1874
      %v1992 = vpack.c.b16 %v1877, %v1876
      %v1993 = vpack.c.b16 %v1879, %v1878
      %v1994 = vpack.c.b16 %v1881, %v1880
      %v1995 = vpack.c.b16 %v1883, %v1882
      %v1996 = vpack.c.b16 %v1885, %v1884
      %v1997 = vpack.c.b16 %v1887, %v1886
      %v1998 = vpack.c.b16 %v1889, %v1888
      %v1999 = vpack.c.b16 %v1891, %v1890
      %v2000 = vpack.c.b16 %v1893, %v1892
      %v2001 = vpack.c.b16 %v1895, %v1894
      %v2002 = vpack.c.b16 %v1897, %v1896
      %v2003 = vpack.c.b16 %v1899, %v1898
      %v2004 = vpack.c.b16 %v1901, %v1900
      %v2005 = vpack.c.b16 %v1903, %v1902
      %v2006 = vpack.c.b16 %v1905, %v1904
      %v2007 = vpack.c.b16 %v1907, %v1906
      %v2008 = vpack.c.b16 %v1909, %v1908
      %v2009 = vpack.c.b16 %v1911, %v1910
      %v2010 = vpack.c.b16 %v1913, %v1912
      %v2011 = vpack.c.b16 %v1915, %v1914
      %v2012 = vpack.c.b16 %v1917, %v1916
      %v2013 = vpack.c.b16 %v1919, %v1918
      %v2014 = vpack.c.b16 %v1921, %v1920
      %v2015 = vpack.c.b16 %v1923, %v1922
      %v2016 = vpack.c.b16 %v1925, %v1924
      %v2017 = vpack.c.b16 %v1927, %v1926
      %v2018 = vpack.c.b16 %v1929, %v1928
      %v2019 = vpack.c.b16 %v1931, %v1930
      %v2020 = vpack.c.b16 %v1933, %v1932
      %v2021 = vpack.c.b16 %v1935, %v1934
      %v2022 = vpack.c.b16 %v1937, %v1936
      %v2023 = vpack.c.b16 %v1939, %v1938
      %v2024 = vpack.c.b16 %v1941, %v1940
      %v2025 = vpack.c.b16 %v1943, %v1942
      %v2026 = vpack.c.b16 %v1945, %v1944
      %v2027 = vpack.c.b16 %v1947, %v1946
      %v2028 = vpack.c.b16 %v1949, %v1948
      %v2029 = vpack.c.b16 %v1951, %v1950
      %v2030 = vpack.c.b16 %v1953, %v1952
      %v2031 = vpack.c.b16 %v1955, %v1954
      %v2032 = vpack.c.b16 %v1957, %v1956
      %v2033 = vpack.c.b16 %v1959, %v1958
      %v2034 = vpack.c.b16 %v1961, %v1960
      %v2035 = vpack.c.b16 %v1963, %v1962
      %2108 = vmatprep.subr.bf16.mxu0 0
      %2109 = vmatpush1.bf16.msra.mxu0 %v1964
      %2110 = vmatprep.subr.bf16.mxu0 0
      %2111 = vmatpush1.bf16.msra.mxu0 %v1965
      %2112 = vmatprep.subr.bf16.mxu0 0
      %2113 = vmatpush1.bf16.msra.mxu0 %v1966
      %2114 = vmatprep.subr.bf16.mxu0 0
      %2115 = vmatpush1.bf16.msra.mxu0 %v1967
      %2116 = vmatprep.subr.bf16.mxu0 0
      %2117 = vmatpush1.bf16.msra.mxu0 %v1968
      %2118 = vmatprep.subr.bf16.mxu0 0
      %2119 = vmatpush1.bf16.msra.mxu0 %v1969
      %2120 = vmatprep.subr.bf16.mxu0 0
      %2121 = vmatpush1.bf16.msra.mxu0 %v1970
      %2122 = vmatprep.subr.bf16.mxu0 0
      %2123 = vmatpush1.bf16.msra.mxu0 %v1971
      %2124 = vmatprep.subr.bf16.mxu0 0
      %2125 = vmatpush1.bf16.msra.mxu0 %v1972
      %2126 = vmatprep.subr.bf16.mxu0 0
      %2127 = vmatpush1.bf16.msra.mxu0 %v1973
      %2128 = vmatprep.subr.bf16.mxu0 0
      %2129 = vmatpush1.bf16.msra.mxu0 %v1974
      %2130 = vmatprep.subr.bf16.mxu0 0
      %2131 = vmatpush1.bf16.msra.mxu0 %v1975
      %2132 = vmatprep.subr.bf16.mxu0 0
      %2133 = vmatpush1.bf16.msra.mxu0 %v1976
      %2134 = vmatprep.subr.bf16.mxu0 0
      %2135 = vmatpush1.bf16.msra.mxu0 %v1977
      %2136 = vmatprep.subr.bf16.mxu0 0
      %2137 = vmatpush1.bf16.msra.mxu0 %v1978
      %2138 = vmatprep.subr.bf16.mxu0 0
      %2139 = vmatpush1.bf16.msra.mxu0 %v1979
      %2140 = vmatprep.mubr.bf16.mxu0 %v1339
      %2141 = vmatmul.mubr.bf16.gmra.mrb[0].mxu0 %v1331
      %v2142 = vpop.f32.mrb[0].mxu0
      %v2143 = vadd.f32 %v1674, %v2142
      %v2144 = vpop.f32.mrb[0].mxu0
      %v2145 = vpop.f32.mrb[0].mxu0
      %v2146 = vadd.f32 %v1674, %v2145
      %v2147 = vpop.f32.mrb[0].mxu0
      %2148 = vmatprep.mubr.bf16.mxu0 %v864
      %2149 = vmatmul.mubr.bf16.gmra.mrb[0].mxu0 %v1332
      %v2150 = vpop.f32.mrb[0].mxu0
      %v2151 = vadd.f32 %v1674, %v2150
      %v2152 = vpop.f32.mrb[0].mxu0
      %v2153 = vpop.f32.mrb[0].mxu0
      %v2154 = vadd.f32 %v1674, %v2153
      %v2155 = vpop.f32.mrb[0].mxu0
      %2156 = vmatprep.mubr.bf16.mxu0 %v865
      %2157 = vmatmul.mubr.bf16.gmra.mrb[0].mxu0 %v1333
      %v2158 = vpop.f32.mrb[0].mxu0
      %v2159 = vadd.f32 %v1674, %v2158
      %v2160 = vpop.f32.mrb[0].mxu0
      %v2161 = vpop.f32.mrb[0].mxu0
      %v2162 = vadd.f32 %v1674, %v2161
      %v2163 = vpop.f32.mrb[0].mxu0
      %2164 = vmatprep.mubr.bf16.mxu0 %v866
      %2165 = vmatmul.mubr.bf16.gmra.mrb[0].mxu0 %v1334
      %v2166 = vpop.f32.mrb[0].mxu0
      %v2167 = vadd.f32 %v1674, %v2166
      %v2168 = vpop.f32.mrb[0].mxu0
      %v2169 = vpop.f32.mrb[0].mxu0
      %v2170 = vadd.f32 %v1674, %v2169
      %v2171 = vpop.f32.mrb[0].mxu0
      %2172 = vmatprep.mubr.bf16.mxu0 %v867
      %2173 = vmatmul.mubr.bf16.gmra.mrb[0].mxu0 %v1335
      %v2174 = vpop.f32.mrb[0].mxu0
      %v2175 = vadd.f32 %v1674, %v2174
      %v2176 = vpop.f32.mrb[0].mxu0
      %v2177 = vpop.f32.mrb[0].mxu0
      %v2178 = vadd.f32 %v1674, %v2177
      %v2179 = vpop.f32.mrb[0].mxu0
      %2180 = vmatprep.mubr.bf16.mxu0 %v868
      %2181 = vmatmul.mubr.bf16.gmra.mrb[0].mxu0 %v1336
      %v2182 = vpop.f32.mrb[0].mxu0
      %v2183 = vadd.f32 %v1674, %v2182
      %v2184 = vpop.f32.mrb[0].mxu0
      %v2185 = vpop.f32.mrb[0].mxu0
      %v2186 = vadd.f32 %v1674, %v2185
      %v2187 = vpop.f32.mrb[0].mxu0
      %2188 = vmatprep.mubr.bf16.mxu0 %v869
      %2189 = vmatmul.mubr.bf16.gmra.mrb[0].mxu0 %v1337
      %v2190 = vpop.f32.mrb[0].mxu0
      %v2191 = vadd.f32 %v1674, %v2190
      %v2192 = vpop.f32.mrb[0].mxu0
      %v2193 = vpop.f32.mrb[0].mxu0
      %v2194 = vadd.f32 %v1674, %v2193
      %v2195 = vpop.f32.mrb[0].mxu0
      %2196 = vmatprep.mubr.bf16.mxu0 %v870
      %2197 = vmatmul.mubr.bf16.gmra.mrb[0].mxu0 %v1338
      %v2198 = vpop.f32.mrb[0].mxu0
      %v2199 = vadd.f32 %v1674, %v2198
      %v2200 = vpop.f32.mrb[0].mxu0
      %v2201 = vpop.f32.mrb[0].mxu0
      %v2202 = vadd.f32 %v1674, %v2201
      %v2203 = vpop.f32.mrb[0].mxu0
      %2204 = vdwg.mxu0
      %2205 = vmatprep.subr.bf16.mxu0 0
      %2206 = vmatpush1.bf16.msra.mxu0 %v1980
      %2207 = vmatprep.subr.bf16.mxu0 0
      %2208 = vmatpush1.bf16.msra.mxu0 %v1981
      %2209 = vmatprep.subr.bf16.mxu0 0
      %2210 = vmatpush1.bf16.msra.mxu0 %v1982
      %2211 = vmatprep.subr.bf16.mxu0 0
      %2212 = vmatpush1.bf16.msra.mxu0 %v1983
      %2213 = vmatprep.subr.bf16.mxu0 0
      %2214 = vmatpush1.bf16.msra.mxu0 %v1984
      %2215 = vmatprep.subr.bf16.mxu0 0
      %2216 = vmatpush1.bf16.msra.mxu0 %v1985
      %2217 = vmatprep.subr.bf16.mxu0 0
      %2218 = vmatpush1.bf16.msra.mxu0 %v1986
      %2219 = vmatprep.subr.bf16.mxu0 0
      %2220 = vmatpush1.bf16.msra.mxu0 %v1987
      %2221 = vmatprep.subr.bf16.mxu0 0
      %2222 = vmatpush1.bf16.msra.mxu0 %v1988
      %2223 = vmatprep.subr.bf16.mxu0 0
      %2224 = vmatpush1.bf16.msra.mxu0 %v1989
      %2225 = vmatprep.subr.bf16.mxu0 0
      %2226 = vmatpush1.bf16.msra.mxu0 %v1990
      %2227 = vmatprep.subr.bf16.mxu0 0
      %2228 = vmatpush1.bf16.msra.mxu0 %v1991
      %2229 = vmatprep.subr.bf16.mxu0 0
      %2230 = vmatpush1.bf16.msra.mxu0 %v1992
      %2231 = vmatprep.subr.bf16.mxu0 0
      %2232 = vmatpush1.bf16.msra.mxu0 %v1993
      %2233 = vmatprep.subr.bf16.mxu0 0
      %2234 = vmatpush1.bf16.msra.mxu0 %v1994
      %2235 = vmatprep.subr.bf16.mxu0 0
      %2236 = vmatpush1.bf16.msra.mxu0 %v1995
      %2237 = vmatprep.mubr.bf16.mxu0 %v1434
      %2238 = vmatmul.mubr.bf16.gmra.mrb[0].mxu0 %v1406
      %v2239 = vpop.f32.mrb[0].mxu0
      %v2240 = vadd.f32 %v2143, %v2239
      %v2241 = vpop.f32.mrb[0].mxu0
      %v2242 = vpop.f32.mrb[0].mxu0
      %v2243 = vadd.f32 %v2146, %v2242
      %v2244 = vpop.f32.mrb[0].mxu0
      %2245 = vmatprep.mubr.bf16.mxu0 %v1435
      %2246 = vmatmul.mubr.bf16.gmra.mrb[0].mxu0 %v1407
      %v2247 = vpop.f32.mrb[0].mxu0
      %v2248 = vadd.f32 %v2151, %v2247
      %v2249 = vpop.f32.mrb[0].mxu0
      %v2250 = vpop.f32.mrb[0].mxu0
      %v2251 = vadd.f32 %v2154, %v2250
      %v2252 = vpop.f32.mrb[0].mxu0
      %2253 = vmatprep.mubr.bf16.mxu0 %v1436
      %2254 = vmatmul.mubr.bf16.gmra.mrb[0].mxu0 %v1408
      %v2255 = vpop.f32.mrb[0].mxu0
      %v2256 = vadd.f32 %v2159, %v2255
      %v2257 = vpop.f32.mrb[0].mxu0
      %v2258 = vpop.f32.mrb[0].mxu0
      %v2259 = vadd.f32 %v2162, %v2258
      %v2260 = vpop.f32.mrb[0].mxu0
      %2261 = vmatprep.mubr.bf16.mxu0 %v1437
      %2262 = vmatmul.mubr.bf16.gmra.mrb[0].mxu0 %v1409
      %v2263 = vpop.f32.mrb[0].mxu0
      %v2264 = vadd.f32 %v2167, %v2263
      %v2265 = vpop.f32.mrb[0].mxu0
      %v2266 = vpop.f32.mrb[0].mxu0
      %v2267 = vadd.f32 %v2170, %v2266
      %v2268 = vpop.f32.mrb[0].mxu0
      %2269 = vmatprep.mubr.bf16.mxu0 %v1438
      %2270 = vmatmul.mubr.bf16.gmra.mrb[0].mxu0 %v1410
      %v2271 = vpop.f32.mrb[0].mxu0
      %v2272 = vadd.f32 %v2175, %v2271
      %v2273 = vpop.f32.mrb[0].mxu0
      %v2274 = vpop.f32.mrb[0].mxu0
      %v2275 = vadd.f32 %v2178, %v2274
      %v2276 = vpop.f32.mrb[0].mxu0
      %2277 = vmatprep.mubr.bf16.mxu0 %v1439
      %2278 = vmatmul.mubr.bf16.gmra.mrb[0].mxu0 %v1411
      %v2279 = vpop.f32.mrb[0].mxu0
      %v2280 = vadd.f32 %v2183, %v2279
      %v2281 = vpop.f32.mrb[0].mxu0
      %v2282 = vpop.f32.mrb[0].mxu0
      %v2283 = vadd.f32 %v2186, %v2282
      %v2284 = vpop.f32.mrb[0].mxu0
      %2285 = vmatprep.mubr.bf16.mxu0 %v1440
      %2286 = vmatmul.mubr.bf16.gmra.mrb[0].mxu0 %v1412
      %v2287 = vpop.f32.mrb[0].mxu0
      %v2288 = vadd.f32 %v2191, %v2287
      %v2289 = vpop.f32.mrb[0].mxu0
      %v2290 = vpop.f32.mrb[0].mxu0
      %v2291 = vadd.f32 %v2194, %v2290
      %v2292 = vpop.f32.mrb[0].mxu0
      %2293 = vmatprep.mubr.bf16.mxu0 %v1441
      %2294 = vmatmul.mubr.bf16.gmra.mrb[0].mxu0 %v1413
      %v2295 = vpop.f32.mrb[0].mxu0
      %v2296 = vadd.f32 %v2199, %v2295
      %v2297 = vpop.f32.mrb[0].mxu0
      %v2298 = vpop.f32.mrb[0].mxu0
      %v2299 = vadd.f32 %v2202, %v2298
      %v2300 = vpop.f32.mrb[0].mxu0
      %2301 = vdwg.mxu0
      %2302 = vmatprep.subr.bf16.mxu0 0
      %2303 = vmatpush1.bf16.msra.mxu0 %v1996
      %2304 = vmatprep.subr.bf16.mxu0 0
      %2305 = vmatpush1.bf16.msra.mxu0 %v1997
      %2306 = vmatprep.subr.bf16.mxu0 0
      %2307 = vmatpush1.bf16.msra.mxu0 %v1998
      %2308 = vmatprep.subr.bf16.mxu0 0
      %2309 = vmatpush1.bf16.msra.mxu0 %v1999
      %2310 = vmatprep.subr.bf16.mxu0 0
      %2311 = vmatpush1.bf16.msra.mxu0 %v2000
      %2312 = vmatprep.subr.bf16.mxu0 0
      %2313 = vmatpush1.bf16.msra.mxu0 %v2001
      %2314 = vmatprep.subr.bf16.mxu0 0
      %2315 = vmatpush1.bf16.msra.mxu0 %v2002
      %2316 = vmatprep.subr.bf16.mxu0 0
      %2317 = vmatpush1.bf16.msra.mxu0 %v2003
      %2318 = vmatprep.subr.bf16.mxu0 0
      %2319 = vmatpush1.bf16.msra.mxu0 %v2004
      %2320 = vmatprep.subr.bf16.mxu0 0
      %2321 = vmatpush1.bf16.msra.mxu0 %v2005
      %2322 = vmatprep.subr.bf16.mxu0 0
      %2323 = vmatpush1.bf16.msra.mxu0 %v2006
      %2324 = vmatprep.subr.bf16.mxu0 0
      %2325 = vmatpush1.bf16.msra.mxu0 %v2007
      %2326 = vmatprep.subr.bf16.mxu0 0
      %2327 = vmatpush1.bf16.msra.mxu0 %v2008
      %2328 = vmatprep.subr.bf16.mxu0 0
      %2329 = vmatpush1.bf16.msra.mxu0 %v2009
      %2330 = vmatprep.subr.bf16.mxu0 0
      %2331 = vmatpush1.bf16.msra.mxu0 %v2010
      %2332 = vmatprep.subr.bf16.mxu0 0
      %2333 = vmatpush1.bf16.msra.mxu0 %v2011
      %2334 = vmatprep.mubr.bf16.mxu0 %v1462
      %2335 = vmatmul.mubr.bf16.gmra.mrb[0].mxu0 %v864
      %v2336 = vpop.f32.mrb[0].mxu0
      %v2337 = vadd.f32 %v2240, %v2336
      %v2338 = vpop.f32.mrb[0].mxu0
      %v2339 = vpop.f32.mrb[0].mxu0
      %v2340 = vadd.f32 %v2243, %v2339
      %v2341 = vpop.f32.mrb[0].mxu0
      %2342 = vmatprep.mubr.bf16.mxu0 %v1463
      %2343 = vmatmul.mubr.bf16.gmra.mrb[0].mxu0 %v865
      %v2344 = vpop.f32.mrb[0].mxu0
      %v2345 = vadd.f32 %v2248, %v2344
      %v2346 = vpop.f32.mrb[0].mxu0
      %v2347 = vpop.f32.mrb[0].mxu0
      %v2348 = vadd.f32 %v2251, %v2347
      %v2349 = vpop.f32.mrb[0].mxu0
      %2350 = vmatprep.mubr.bf16.mxu0 %v1464
      %2351 = vmatmul.mubr.bf16.gmra.mrb[0].mxu0 %v866
      %v2352 = vpop.f32.mrb[0].mxu0
      %v2353 = vadd.f32 %v2256, %v2352
      %v2354 = vpop.f32.mrb[0].mxu0
      %v2355 = vpop.f32.mrb[0].mxu0
      %v2356 = vadd.f32 %v2259, %v2355
      %v2357 = vpop.f32.mrb[0].mxu0
      %2358 = vmatprep.mubr.bf16.mxu0 %v1465
      %2359 = vmatmul.mubr.bf16.gmra.mrb[0].mxu0 %v867
      %v2360 = vpop.f32.mrb[0].mxu0
      %v2361 = vadd.f32 %v2264, %v2360
      %v2362 = vpop.f32.mrb[0].mxu0
      %v2363 = vpop.f32.mrb[0].mxu0
      %v2364 = vadd.f32 %v2267, %v2363
      %v2365 = vpop.f32.mrb[0].mxu0
      %2366 = vmatprep.mubr.bf16.mxu0 %v1466
      %2367 = vmatmul.mubr.bf16.gmra.mrb[0].mxu0 %v868
      %v2368 = vpop.f32.mrb[0].mxu0
      %v2369 = vadd.f32 %v2272, %v2368
      %v2370 = vpop.f32.mrb[0].mxu0
      %v2371 = vpop.f32.mrb[0].mxu0
      %v2372 = vadd.f32 %v2275, %v2371
      %v2373 = vpop.f32.mrb[0].mxu0
      %2374 = vmatprep.mubr.bf16.mxu0 %v1467
      %2375 = vmatmul.mubr.bf16.gmra.mrb[0].mxu0 %v869
      %v2376 = vpop.f32.mrb[0].mxu0
      %v2377 = vadd.f32 %v2280, %v2376
      %v2378 = vpop.f32.mrb[0].mxu0
      %v2379 = vpop.f32.mrb[0].mxu0
      %v2380 = vadd.f32 %v2283, %v2379
      %v2381 = vpop.f32.mrb[0].mxu0
      %2382 = vmatprep.mubr.bf16.mxu0 %v1468
      %2383 = vmatmul.mubr.bf16.gmra.mrb[0].mxu0 %v870
      %v2384 = vpop.f32.mrb[0].mxu0
      %v2385 = vadd.f32 %v2288, %v2384
      %v2386 = vpop.f32.mrb[0].mxu0
      %v2387 = vpop.f32.mrb[0].mxu0
      %v2388 = vadd.f32 %v2291, %v2387
      %v2389 = vpop.f32.mrb[0].mxu0
      %2390 = vmatprep.mubr.bf16.mxu0 %v1469
      %2391 = vmatmul.mubr.bf16.gmra.mrb[0].mxu0 %v871
      %v2392 = vpop.f32.mrb[0].mxu0
      %v2393 = vadd.f32 %v2296, %v2392
      %v2394 = vpop.f32.mrb[0].mxu0
      %v2395 = vpop.f32.mrb[0].mxu0
      %v2396 = vadd.f32 %v2299, %v2395
      %v2397 = vpop.f32.mrb[0].mxu0
      %2398 = vdwg.mxu0
      %2399 = vmatprep.subr.bf16.mxu0 0
      %2400 = vmatpush1.bf16.msra.mxu0 %v2012
      %2401 = vmatprep.subr.bf16.mxu0 0
      %2402 = vmatpush1.bf16.msra.mxu0 %v2013
      %2403 = vmatprep.subr.bf16.mxu0 0
      %2404 = vmatpush1.bf16.msra.mxu0 %v2014
      %2405 = vmatprep.subr.bf16.mxu0 0
      %2406 = vmatpush1.bf16.msra.mxu0 %v2015
      %2407 = vmatprep.subr.bf16.mxu0 0
      %2408 = vmatpush1.bf16.msra.mxu0 %v2016
      %2409 = vmatprep.subr.bf16.mxu0 0
      %2410 = vmatpush1.bf16.msra.mxu0 %v2017
      %2411 = vmatprep.subr.bf16.mxu0 0
      %2412 = vmatpush1.bf16.msra.mxu0 %v2018
      %2413 = vmatprep.subr.bf16.mxu0 0
      %2414 = vmatpush1.bf16.msra.mxu0 %v2019
      %2415 = vmatprep.subr.bf16.mxu0 0
      %2416 = vmatpush1.bf16.msra.mxu0 %v2020
      %2417 = vmatprep.subr.bf16.mxu0 0
      %2418 = vmatpush1.bf16.msra.mxu0 %v2021
      %2419 = vmatprep.subr.bf16.mxu0 0
      %2420 = vmatpush1.bf16.msra.mxu0 %v2022
      %2421 = vmatprep.subr.bf16.mxu0 0
      %2422 = vmatpush1.bf16.msra.mxu0 %v2023
      %2423 = vmatprep.subr.bf16.mxu0 0
      %2424 = vmatpush1.bf16.msra.mxu0 %v2024
      %2425 = vmatprep.subr.bf16.mxu0 0
      %2426 = vmatpush1.bf16.msra.mxu0 %v2025
      %2427 = vmatprep.subr.bf16.mxu0 0
      %2428 = vmatpush1.bf16.msra.mxu0 %v2026
      %2429 = vmatprep.subr.bf16.mxu0 0
      %2430 = vmatpush1.bf16.msra.mxu0 %v2027
      %2431 = vmatprep.mubr.bf16.mxu0 %v865
      %2432 = vmatmul.mubr.bf16.gmra.mrb[0].mxu0 %v1489
      %v2433 = vpop.f32.mrb[0].mxu0
      %v2434 = vadd.f32 %v2337, %v2433
      %v2435 = vpop.f32.mrb[0].mxu0
      %v2436 = vpop.f32.mrb[0].mxu0
      %v2437 = vadd.f32 %v2340, %v2436
      %v2438 = vpop.f32.mrb[0].mxu0
      %2439 = vmatprep.mubr.bf16.mxu0 %v866
      %2440 = vmatmul.mubr.bf16.gmra.mrb[0].mxu0 %v1490
      %v2441 = vpop.f32.mrb[0].mxu0
      %v2442 = vadd.f32 %v2345, %v2441
      %v2443 = vpop.f32.mrb[0].mxu0
      %v2444 = vpop.f32.mrb[0].mxu0
      %v2445 = vadd.f32 %v2348, %v2444
      %v2446 = vpop.f32.mrb[0].mxu0
      %2447 = vmatprep.mubr.bf16.mxu0 %v867
      %2448 = vmatmul.mubr.bf16.gmra.mrb[0].mxu0 %v1491
      %v2449 = vpop.f32.mrb[0].mxu0
      %v2450 = vadd.f32 %v2353, %v2449
      %v2451 = vpop.f32.mrb[0].mxu0
      %v2452 = vpop.f32.mrb[0].mxu0
      %v2453 = vadd.f32 %v2356, %v2452
      %v2454 = vpop.f32.mrb[0].mxu0
      %2455 = vmatprep.mubr.bf16.mxu0 %v868
      %2456 = vmatmul.mubr.bf16.gmra.mrb[0].mxu0 %v1492
      %v2457 = vpop.f32.mrb[0].mxu0
      %v2458 = vadd.f32 %v2361, %v2457
      %v2459 = vpop.f32.mrb[0].mxu0
      %v2460 = vpop.f32.mrb[0].mxu0
      %v2461 = vadd.f32 %v2364, %v2460
      %v2462 = vpop.f32.mrb[0].mxu0
      %2463 = vmatprep.mubr.bf16.mxu0 %v869
      %2464 = vmatmul.mubr.bf16.gmra.mrb[0].mxu0 %v1493
      %v2465 = vpop.f32.mrb[0].mxu0
      %v2466 = vadd.f32 %v2369, %v2465
      %v2467 = vpop.f32.mrb[0].mxu0
      %v2468 = vpop.f32.mrb[0].mxu0
      %v2469 = vadd.f32 %v2372, %v2468
      %v2470 = vpop.f32.mrb[0].mxu0
      %2471 = vmatprep.mubr.bf16.mxu0 %v870
      %2472 = vmatmul.mubr.bf16.gmra.mrb[0].mxu0 %v1494
      %v2473 = vpop.f32.mrb[0].mxu0
      %v2474 = vadd.f32 %v2377, %v2473
      %v2475 = vpop.f32.mrb[0].mxu0
      %v2476 = vpop.f32.mrb[0].mxu0
      %v2477 = vadd.f32 %v2380, %v2476
      %v2478 = vpop.f32.mrb[0].mxu0
      %2479 = vmatprep.mubr.bf16.mxu0 %v871
      %2480 = vmatmul.mubr.bf16.gmra.mrb[0].mxu0 %v1495
      %v2481 = vpop.f32.mrb[0].mxu0
      %v2482 = vadd.f32 %v2385, %v2481
      %v2483 = vpop.f32.mrb[0].mxu0
      %v2484 = vpop.f32.mrb[0].mxu0
      %v2485 = vadd.f32 %v2388, %v2484
      %v2486 = vpop.f32.mrb[0].mxu0
      %2487 = vmatprep.mubr.bf16.mxu0 %v1497
      %2488 = vmatmul.mubr.bf16.gmra.mrb[0].mxu0 %v1496
      %v2489 = vpop.f32.mrb[0].mxu0
      %v2490 = vadd.f32 %v2393, %v2489
      %v2491 = vpop.f32.mrb[0].mxu0
      %v2492 = vpop.f32.mrb[0].mxu0
      %v2493 = vadd.f32 %v2396, %v2492
      %v2494 = vpop.f32.mrb[0].mxu0
      %2495 = vdwg.mxu0
      %2496 = vmatprep.subr.bf16.mxu0 0
      %2497 = vmatpush1.bf16.msra.mxu0 %v2028
      %2498 = vmatprep.subr.bf16.mxu0 0
      %2499 = vmatpush1.bf16.msra.mxu0 %v2029
      %2500 = vmatprep.subr.bf16.mxu0 0
      %2501 = vmatpush1.bf16.msra.mxu0 %v2030
      %2502 = vmatprep.subr.bf16.mxu0 0
      %2503 = vmatpush1.bf16.msra.mxu0 %v2031
      %2504 = vmatprep.subr.bf16.mxu0 0
      %2505 = vmatpush1.bf16.msra.mxu0 %v2032
      %2506 = vmatprep.subr.bf16.mxu0 0
      %2507 = vmatpush1.bf16.msra.mxu0 %v2033
      %2508 = vmatprep.subr.bf16.mxu0 0
      %2509 = vmatpush1.bf16.msra.mxu0 %v2034
      %2510 = vmatprep.subr.bf16.mxu0 0
      %2511 = vmatpush1.bf16.msra.mxu0 %v2035
      %2512 = vmatprep.subr.bf16.mxu0 0
      %2513 = vmatpush1.bf16.msra.mxu0 0
      %2514 = vmatprep.subr.bf16.mxu0 0
      %2515 = vmatpush1.bf16.msra.mxu0 0
      %2516 = vmatprep.subr.bf16.mxu0 0
      %2517 = vmatpush1.bf16.msra.mxu0 0
      %2518 = vmatprep.subr.bf16.mxu0 0
      %2519 = vmatpush1.bf16.msra.mxu0 0
      %2520 = vmatprep.subr.bf16.mxu0 0
      %2521 = vmatpush1.bf16.msra.mxu0 0
      %2522 = vmatprep.subr.bf16.mxu0 0
      %2523 = vmatpush1.bf16.msra.mxu0 0
      %2524 = vmatprep.subr.bf16.mxu0 0
      %2525 = vmatpush1.bf16.msra.mxu0 0
      %2526 = vmatprep.subr.bf16.mxu0 0
      %2527 = vmatpush1.bf16.msra.mxu0 0
      %2528 = vmatprep.mubr.bf16.mxu0 0
      %2529 = vmatmul.mubr.bf16.gmra.mrb[0].mxu0 %v1517
      %v2530 = vpop.f32.mrb[0].mxu0
      %v2531 = vadd.f32 %v2434, %v2530
      %v2532 = vpop.f32.mrb[0].mxu0
      %v2533 = vpop.f32.mrb[0].mxu0
      %v2534 = vadd.f32 %v2437, %v2533
      %v2535 = vpop.f32.mrb[0].mxu0
      %2536 = vmatprep.mubr.bf16.mxu0 0
      %2537 = vmatmul.mubr.bf16.gmra.mrb[0].mxu0 %v1518
      %v2538 = vpop.f32.mrb[0].mxu0
      %v2539 = vadd.f32 %v2442, %v2538
      %v2540 = vpop.f32.mrb[0].mxu0
      %v2541 = vpop.f32.mrb[0].mxu0
      %v2542 = vadd.f32 %v2445, %v2541
      %v2543 = vpop.f32.mrb[0].mxu0
      %2544 = vmatprep.mubr.bf16.mxu0 0
      %2545 = vmatmul.mubr.bf16.gmra.mrb[0].mxu0 %v1519
      %v2546 = vpop.f32.mrb[0].mxu0
      %v2547 = vadd.f32 %v2450, %v2546
      %v2548 = vpop.f32.mrb[0].mxu0
      %v2549 = vpop.f32.mrb[0].mxu0
      %v2550 = vadd.f32 %v2453, %v2549
      %v2551 = vpop.f32.mrb[0].mxu0
      %2552 = vmatprep.mubr.bf16.mxu0 0
      %2553 = vmatmul.mubr.bf16.gmra.mrb[0].mxu0 %v1520
      %v2554 = vpop.f32.mrb[0].mxu0
      %v2555 = vadd.f32 %v2458, %v2554
      %v2556 = vpop.f32.mrb[0].mxu0
      %v2557 = vpop.f32.mrb[0].mxu0
      %v2558 = vadd.f32 %v2461, %v2557
      %v2559 = vpop.f32.mrb[0].mxu0
      %2560 = vmatprep.mubr.bf16.mxu0 0
      %2561 = vmatmul.mubr.bf16.gmra.mrb[0].mxu0 %v1521
      %v2562 = vpop.f32.mrb[0].mxu0
      %v2563 = vadd.f32 %v2466, %v2562
      %v2564 = vpop.f32.mrb[0].mxu0
      %v2565 = vpop.f32.mrb[0].mxu0
      %v2566 = vadd.f32 %v2469, %v2565
      %v2567 = vpop.f32.mrb[0].mxu0
      %2568 = vmatprep.mubr.bf16.mxu0 0
      %2569 = vmatmul.mubr.bf16.gmra.mrb[0].mxu0 %v1522
      %v2570 = vpop.f32.mrb[0].mxu0
      %v2571 = vadd.f32 %v2474, %v2570
      %v2572 = vpop.f32.mrb[0].mxu0
      %v2573 = vpop.f32.mrb[0].mxu0
      %v2574 = vadd.f32 %v2477, %v2573
      %v2575 = vpop.f32.mrb[0].mxu0
      %2576 = vmatprep.mubr.bf16.mxu0 0
      %2577 = vmatmul.mubr.bf16.gmra.mrb[0].mxu0 %v1523
      %v2578 = vpop.f32.mrb[0].mxu0
      %v2579 = vadd.f32 %v2482, %v2578
      %v2580 = vpop.f32.mrb[0].mxu0
      %v2581 = vpop.f32.mrb[0].mxu0
      %v2582 = vadd.f32 %v2485, %v2581
      %v2583 = vpop.f32.mrb[0].mxu0
      %2584 = vmatprep.mubr.bf16.mxu0 0
      %2585 = vmatmul.mubr.bf16.gmra.mrb[0].mxu0 %v1524
      %v2586 = vpop.f32.mrb[0].mxu0
      %v2587 = vadd.f32 %v2490, %v2586
      %v2588 = vpop.f32.mrb[0].mxu0
      %v2589 = vpop.f32.mrb[0].mxu0
      %v2590 = vadd.f32 %v2493, %v2589
      %v2591 = vpop.f32.mrb[0].mxu0
      %2592 = vdwg.mxu0
      %v2593 = vmax.f32 %v2531, 0.0
      %v2594 = vmax.f32 %v2534, 0.0
      %v2595 = vmax.f32 %v2539, 0.0
      %v2596 = vmax.f32 %v2542, 0.0
      %v2597 = vmax.f32 %v2547, 0.0
      %v2598 = vmax.f32 %v2550, 0.0
      %v2599 = vmax.f32 %v2555, 0.0
      %v2600 = vmax.f32 %v2558, 0.0
      %v2601 = vmax.f32 %v2563, 0.0
      %v2602 = vmax.f32 %v2566, 0.0
      %v2603 = vmax.f32 %v2571, 0.0
      %v2604 = vmax.f32 %v2574, 0.0
      %v2605 = vmax.f32 %v2579, 0.0
      %v2606 = vmax.f32 %v2582, 0.0
      %v2607 = vmax.f32 %v2587, 0.0
      %v2608 = vmax.f32 %v2590, 0.0
      %2609 = vst [vmem:[%s499] sm:$0xff] %v1040
      %2610 = vst [vmem:[%s499 + $0x10] sm:$0xff] %v1041
      %2611 = vst [vmem:[%s499 + $0x20] sm:$0xff] %v1042
      %2612 = vst [vmem:[%s499 + $0x30] sm:$0xff] %v1043
      %2613 = vst [vmem:[%s499 + $0x40] sm:$0xff] %v1044
      %2614 = vst [vmem:[%s499 + $0x50] sm:$0xff] %v1045
      %2615 = vst [vmem:[%s499 + $0x60] sm:$0xff] %v1046
      %2616 = vst [vmem:[%s499 + $0x70] sm:$0xff] %v1047
      %2617 = vst [vmem:[%s499 + $0x80] sm:$0xff] %v1048
      %2618 = vst [vmem:[%s499 + $0x90] sm:$0xff] %v1049
      %2619 = vst [vmem:[%s499 + $0xa0] sm:$0xff] %v1050
      %2620 = vst [vmem:[%s499 + $0xb0] sm:$0xff] %v1051
      %2621 = vst [vmem:[%s499 + $0xc0] sm:$0xff] %v1052
      %2622 = vst [vmem:[%s499 + $0xd0] sm:$0xff] %v1053
      %2623 = vst [vmem:[%s499 + $0xe0] sm:$0xff] %v1054
      %2624 = vst [vmem:[%s499 + $0xf0] sm:$0xff] %v1055
      %2625 = vst [vmem:[%s499 + $0x8] sm:$0xff] %v2593
      %2626 = vst [vmem:[%s499 + $0x18] sm:$0xff] %v2594
      %2627 = vst [vmem:[%s499 + $0x28] sm:$0xff] %v2595
      %2628 = vst [vmem:[%s499 + $0x38] sm:$0xff] %v2596
      %2629 = vst [vmem:[%s499 + $0x48] sm:$0xff] %v2597
      %2630 = vst [vmem:[%s499 + $0x58] sm:$0xff] %v2598
      %2631 = vst [vmem:[%s499 + $0x68] sm:$0xff] %v2599
      %2632 = vst [vmem:[%s499 + $0x78] sm:$0xff] %v2600
      %2633 = vst [vmem:[%s499 + $0x88] sm:$0xff] %v2601
      %2634 = vst [vmem:[%s499 + $0x98] sm:$0xff] %v2602
      %2635 = vst [vmem:[%s499 + $0xa8] sm:$0xff] %v2603
      %2636 = vst [vmem:[%s499 + $0xb8] sm:$0xff] %v2604
      %2637 = vst [vmem:[%s499 + $0xc8] sm:$0xff] %v2605
      %2638 = vst [vmem:[%s499 + $0xd8] sm:$0xff] %v2606
      %2639 = vst [vmem:[%s499 + $0xe8] sm:$0xff] %v2607
      %2640 = vst [vmem:[%s499 + $0xf8] sm:$0xff] %v2608
      %s2641 = smul.u32 8, %s25
      %p2642 = scmp.lt.s32.totalorder %s24, 1
      %s2643 = scalar_select %p2642, %s24, 1
      %p2644 = scmp.lt.s32.totalorder %s2641, 15
      %s2645 = scalar_select %p2644, %s2641, 15
      %s2646 = smul.addr %s2645, 4
      %s2647 = smul.addr %s2643, 64
      %s2648 = sadd.s32 %s2646, %s2647
      %s2649 = smul.addr %s2648, 8
      %s2650 = scalar_lea.vmem %s9, %s2649
      // Predicated region
      $region57: #{fire_forward.1} parent=55 // pred_check
        %p2651 = pneg %p278
      $region58: #{fire_forward.1} parent=55 // pred_check_branch
        %2653 = sbr.rel (%p2651) target = $region60
      $region59: #{fire_forward.1} parent=55 // pred_region
        %s2654 = smul.u32 8, %s25
      $region60: #{fire_forward.1} parent=55 // pred_fallthru
        _
    $region56: #{fire_forward.1} parent=5 // pred_fallthru
      _
    %p2655 = scmp.le.s32.totalorder 2, %s15
    // Predicated region
    $region61: #{fire_forward.1} parent=5 // pred_check
      %p2656 = pneg %p2655
    $region62: #{fire_forward.1} parent=5 // pred_check_branch
      %2658 = sbr.rel (%p2656) target = $region64
    $region63: #{fire_forward.1} parent=5 // pred_region
      %s2659 = ssub.s32 %s15, 2
      // Predicated region
      $region65: #{fire_forward.1} parent=63 // pred_check
        %p2660 = pneg %p284
      $region66: #{fire_forward.1} parent=63 // pred_check_branch
        %2662 = sbr.rel (%p2660) target = $region68
      $region67: #{fire_forward.1} parent=63 // pred_region
        %s2663 = smul.u32 8, %s27
        %p2664 = scmp.lt.s32.totalorder %s26, 1
        %s2665 = scalar_select %p2664, %s26, 1
        %p2666 = scmp.lt.s32.totalorder %s2663, 15
        %s2667 = scalar_select %p2666, %s2663, 15
        %s2668 = smul.addr %s2667, 4
        %s2669 = smul.addr %s2665, 64
        %s2670 = sadd.s32 %s2668, %s2669
        %s2671 = smul.addr %s2670, 8
        %s2672 = scalar_lea.vmem %s9, %s2671
      $region68: #{fire_forward.1} parent=63 // pred_fallthru
        _
    $region64: #{fire_forward.1} parent=5 // pred_fallthru
      _
  $region6: #{fire_forward.1} parent=0 // loop_footer
    %s19 = sadd.s32 1, %s15
  $region7: #{fire_forward.1} parent=0 // loop_footer_branch
    %14 = sbr.rel target = $region3
  $region8: #{fire_forward.1} parent=0 // loop_exit
    _

</llo_original>
